<compile_context>
chip_gen: v6e
topology: v6e:2x2x1
jax: 0.10.0
libtpu: 0.0.40
codegen_flags: <defaults>
</compile_context>

<pallas_src>
import numpy as np
import jax
import jax.numpy as jnp
from jax.experimental import pallas as pl
from jax.experimental.pallas import tpu as pltpu


def _make_ffparser_kernel(compute_dtype):
    """Kernel factory; compute_dtype is the MXU operand dtype (f32 default)."""

    def kernel(x_ref, wp_ref, fh_ref, wfwd_ref, gh_ref, winv_ref, o_ref):
        n = x_ref.shape[1]          # channels in this block
        h = x_ref.shape[2]
        w = x_ref.shape[3]
        wf = wp_ref.shape[2]        # W // 2 + 1
        h2 = 2 * h

        x = x_ref[0].astype(compute_dtype)                    # (n, h, w)

        # ---- forward DFT along H: one batched matmul with the stacked
        #      operator FH = [chf; -shf]  ->  s = [a ; b], a = Re, b = Im.
        fh = jnp.broadcast_to(fh_ref[...], (n, h2, h))        # hoisted once
        s = jax.lax.dot_general(
            fh, x,
            dimension_numbers=(((2,), (1,)), ((0,), (0,))),
            preferred_element_type=jnp.float32)               # (n, 2h, w)

        # ---- forward rDFT along W: two big 2-D GEMMs (M = n*2h rows).
        #      ortho scale 1/sqrt(H*W) is baked into cwf/swf.
        s2 = s.reshape(n * h2, w).astype(compute_dtype)
        t_cos = jnp.dot(s2, wfwd_ref[0],
                        preferred_element_type=jnp.float32).reshape(n, h2, wf)
        t_sin = jnp.dot(s2, wfwd_ref[1],
                        preferred_element_type=jnp.float32).reshape(n, h2, wf)
        yr = t_cos[:, :h, :] + t_sin[:, h:, :]                # a@cwf + b@swf
        yi = t_cos[:, h:, :] - t_sin[:, :h, :]                # b@cwf - a@swf

        # ---- elementwise complex multiply by the learned spectral filter
        #      (kept in f32; wp = [wr ; wi] stacked along the sublane axis).
        wr = wp_ref[:, :h, :]
        wi = wp_ref[:, h:, :]
        zr = yr * wr - yi * wi
        zi = yr * wi + yi * wr

        # ---- inverse DFT along H: one batched matmul with the block operator
        #      GH = [[chi, -shi], [shi, chi]] (ortho scale 1/sqrt(H) baked in).
        z = jnp.concatenate([zr, zi], axis=1).astype(compute_dtype)  # (n,2h,wf)
        gh = jnp.broadcast_to(gh_ref[...], (n, h2, h2))
        ws = jax.lax.dot_general(
            gh, z,
            dimension_numbers=(((2,), (1,)), ((0,), (0,))),
            preferred_element_type=jnp.float32)               # (n, 2h, wf)

        # ---- Hermitian inverse rDFT along W (Hermitian duplication factors
        #      and 1/sqrt(W) baked into cwit/swit): two 2-D GEMMs.
        w1r = ws[:, :h, :].reshape(n * h, wf).astype(compute_dtype)
        w1i = ws[:, h:, :].reshape(n * h, wf).astype(compute_dtype)
        o1 = jnp.dot(w1r, winv_ref[0], preferred_element_type=jnp.float32)
        o2 = jnp.dot(w1i, winv_ref[1], preferred_element_type=jnp.float32)

        o_ref[0] = (o1 - o2).reshape(n, h, w).astype(o_ref.dtype)

    return kernel


def _dft_operators(H, W):
    """Pre-stacked real DFT operators (float32) with ortho scaling baked in."""
    Wf = W // 2 + 1
    sH = 1.0 / np.sqrt(H)
    sW = 1.0 / np.sqrt(W)

    k = np.arange(H)
    ang_h = 2.0 * np.pi * np.outer(k, k) / H                  # (H, H), symmetric
    chf = np.cos(ang_h)
    shf = np.sin(ang_h)

    w = np.arange(W)
    kw = np.arange(Wf)
    ang_w = 2.0 * np.pi * np.outer(w, kw) / W                 # (W, Wf)
    cwf = np.cos(ang_w) * (sH * sW)
    swf = np.sin(ang_w) * (sH * sW)

    chi = chf * sH
    shi = shf * sH

    # Hermitian duplication weights for the real inverse transform along W.
    ck = np.full((Wf,), 2.0)
    ck[0] = 1.0
    if W % 2 == 0:
        ck[-1] = 1.0
    cwit = (np.cos(ang_w) * ck).T * sW                        # (Wf, W)
    swit = (np.sin(ang_w) * ck).T * sW                        # (Wf, W)

    FH = np.concatenate([chf, -shf], axis=0)                  # (2H, H)
    WFWD = np.stack([cwf, swf], axis=0)                       # (2, W, Wf)
    GH = np.block([[chi, -shi], [shi, chi]])                  # (2H, 2H)
    WINV = np.stack([cwit, swit], axis=0)                     # (2, Wf, W)
    return [m.astype(np.float32) for m in (FH, WFWD, GH, WINV)]


def ffparser_forward(x, complex_weight, *, c_block=None,
                     compute_dtype=jnp.float32):
    """x: (B, C, H, W); complex_weight: (C, H, W//2+1, 2) float32."""
    B, C, H, W = x.shape
    assert H == W, "height and width are not equal"
    Wf = W // 2 + 1
    if complex_weight.shape != (C, H, Wf, 2):
        raise ValueError(
            f"complex_weight shape {complex_weight.shape} does not match the "
            f"required (C, H, W//2+1, 2) = {(C, H, Wf, 2)} for input {x.shape}")

    # Channel-block size: largest divisor of C that is <= 16.  Keeps the
    # per-step VMEM footprint bounded (fits v7x's 64 MiB VMEM at production
    # H=W=128) while still amortising per-grid-step overhead.
    if c_block is None:
        c_block = 1
        for cand in range(min(C, 16), 0, -1):
            if C % cand == 0:
                c_block = cand
                break
    assert C % c_block == 0, "c_block must divide C"
    n_cblk = C // c_block

    x = x.astype(jnp.float32)
    # Pack the filter as [wr ; wi] along the H (sublane) axis: (C, 2H, Wf).
    wp = jnp.concatenate([complex_weight[..., 0], complex_weight[..., 1]],
                         axis=1).astype(jnp.float32)

    ops_np = _dft_operators(H, W)
    fh, wfwd, gh, winv = [jnp.asarray(m, dtype=compute_dtype) for m in ops_np]

    grid = (B, n_cblk)
    grid_spec = pltpu.PrefetchScalarGridSpec(
        num_scalar_prefetch=0,
        grid=grid,
        in_specs=[
            pl.BlockSpec((1, c_block, H, W), lambda b, cb: (b, cb, 0, 0)),  # x
            pl.BlockSpec((c_block, 2 * H, Wf), lambda b, cb: (cb, 0, 0)),   # wp
            pl.BlockSpec((2 * H, H), lambda b, cb: (0, 0)),                 # FH
            pl.BlockSpec((2, W, Wf), lambda b, cb: (0, 0, 0)),              # WFWD
            pl.BlockSpec((2 * H, 2 * H), lambda b, cb: (0, 0)),             # GH
            pl.BlockSpec((2, Wf, W), lambda b, cb: (0, 0, 0)),              # WINV
        ],
        out_specs=pl.BlockSpec((1, c_block, H, W), lambda b, cb: (b, cb, 0, 0)),
    )

    # Advisory cost estimate so XLA can overlap this call with neighbours.
    per_chan_flops = (
        2 * (2 * H) * H * W            # forward H
        + 2 * 2 * (2 * H) * W * Wf     # forward W (two GEMMs)
        + 2 * (2 * H) * (2 * H) * Wf   # inverse H
        + 2 * 2 * H * Wf * W           # inverse W (two GEMMs)
        + 6 * H * Wf)                  # complex multiply
    flops = int(B * C * per_chan_flops)
    op_bytes = sum(int(np.prod(m.shape)) * 4 for m in ops_np)
    bytes_accessed = int(2 * B * C * H * W * 4 + wp.size * 4 + op_bytes)

    out = pl.pallas_call(
        _make_ffparser_kernel(compute_dtype),
        out_shape=jax.ShapeDtypeStruct((B, C, H, W), jnp.float32),
        grid_spec=grid_spec,
        compiler_params=pltpu.CompilerParams(
            dimension_semantics=("parallel", "parallel")),
        cost_estimate=pl.CostEstimate(flops=flops, transcendentals=0,
                                      bytes_accessed=bytes_accessed),
    )(x, wp, fh, wfwd, gh, winv)
    return out


if __name__ == "__main__":
    B, C, H, W = 2, 4, 16, 16
    Wf = W // 2 + 1

    key = jax.random.PRNGKey(0)
    kx, kw = jax.random.split(key)
    x = jax.random.normal(kx, (B, C, H, W), dtype=jnp.float32)
    # nn.Parameter(torch.randn(dim, h, w, 2) * 0.02) with dim=C, h=H, w=W//2+1
    complex_weight = 0.02 * jax.random.normal(kw, (C, H, Wf, 2),
                                              dtype=jnp.float32)

    out = ffparser_forward(x, complex_weight)
    out = jax.block_until_ready(out)

    # Host-side numpy reference of the torch semantics.
    xn = np.asarray(x, dtype=np.float32)
    wn = (np.asarray(complex_weight[..., 0])
          + 1j * np.asarray(complex_weight[..., 1]))
    xf = np.fft.rfft2(xn, axes=(2, 3), norm="ortho")
    ref = np.fft.irfft2(xf * wn, s=(H, W), axes=(2, 3), norm="ortho")
    np.testing.assert_allclose(np.asarray(out), ref.astype(np.float32),
                               rtol=1e-4, atol=1e-4)

    print("KERNEL_OK")
</pallas_src>

<mosaic_0001>
module attributes {stable_mosaic.version = 11 : i64} {
  func.func @kernel(%arg0: i32, %arg1: i32, %arg2: memref<1x4x16x16xf32, #tpu.memory_space<vmem>>, %arg3: memref<4x32x9xf32, #tpu.memory_space<vmem>>, %arg4: memref<32x16xf32, #tpu.memory_space<vmem>>, %arg5: memref<2x16x9xf32, #tpu.memory_space<vmem>>, %arg6: memref<32x32xf32, #tpu.memory_space<vmem>>, %arg7: memref<2x9x16xf32, #tpu.memory_space<vmem>>, %arg8: memref<1x4x16x16xf32, #tpu.memory_space<vmem>>) attributes {dimension_semantics = [#tpu.dimension_semantics<parallel>, #tpu.dimension_semantics<parallel>], iteration_bounds = array<i64: 2, 1>, scalar_prefetch = 0 : i64, scratch_operands = 0 : i64, tpu.core_type = #tpu.core_type<tc>, window_params = [{transform_indices = @transform_0, window_bounds = array<i64: 1, 4, 16, 16>}, {transform_indices = @transform_1, window_bounds = array<i64: 4, 32, 9>}, {pipeline_mode = #tpu.pipeline_mode<synchronous>, transform_indices = @transform_2, window_bounds = array<i64: 32, 16>}, {pipeline_mode = #tpu.pipeline_mode<synchronous>, transform_indices = @transform_3, window_bounds = array<i64: 2, 16, 9>}, {pipeline_mode = #tpu.pipeline_mode<synchronous>, transform_indices = @transform_4, window_bounds = array<i64: 32, 32>}, {pipeline_mode = #tpu.pipeline_mode<synchronous>, transform_indices = @transform_5, window_bounds = array<i64: 2, 9, 16>}, {transform_indices = @transform_6, window_bounds = array<i64: 1, 4, 16, 16>}]} {
    %c0 = arith.constant 0 : index
    %c0_0 = arith.constant 0 : index
    %c0_1 = arith.constant 0 : index
    %c0_2 = arith.constant 0 : index
    %0 = vector.load %arg2[%c0, %c0_0, %c0_1, %c0_2] : memref<1x4x16x16xf32, #tpu.memory_space<vmem>>, vector<1x4x16x16xf32>
    %1 = vector.shape_cast %0 : vector<1x4x16x16xf32> to vector<4x16x16xf32>
    %c0_3 = arith.constant 0 : index
    %c0_4 = arith.constant 0 : index
    %2 = vector.load %arg4[%c0_3, %c0_4] : memref<32x16xf32, #tpu.memory_space<vmem>>, vector<32x16xf32>
    %3 = vector.shape_cast %2 : vector<32x16xf32> to vector<1x32x16xf32>
    %4 = vector.broadcast %3 : vector<1x32x16xf32> to vector<4x32x16xf32>
    %cst = arith.constant dense<0.000000e+00> : vector<4x32x16xf32>
    %5 = tpu.matmul %4, %1, %cst {dimension_numbers = #tpu.dot_dimension_numbers<[2], [1], [1], [2], [0, 0, 0, 1, 1, 2], [0], [0]>} : vector<4x32x16xf32>, vector<4x16x16xf32>, vector<4x32x16xf32> -> vector<4x32x16xf32>
    %6 = vector.shape_cast %5 : vector<4x32x16xf32> to vector<128x16xf32>
    %c0_5 = arith.constant 0 : index
    %c0_6 = arith.constant 0 : index
    %c0_7 = arith.constant 0 : index
    %7 = vector.load %arg5[%c0_5, %c0_6, %c0_7] : memref<2x16x9xf32, #tpu.memory_space<vmem>>, vector<1x16x9xf32>
    %8 = vector.shape_cast %7 : vector<1x16x9xf32> to vector<16x9xf32>
    %cst_8 = arith.constant dense<0.000000e+00> : vector<128x9xf32>
    %9 = tpu.matmul %6, %8, %cst_8 {dimension_numbers = #tpu.dot_dimension_numbers<[1], [0], [0], [1], [0, 0, 1, 1], [], []>} : vector<128x16xf32>, vector<16x9xf32>, vector<128x9xf32> -> vector<128x9xf32>
    %10 = vector.shape_cast %9 : vector<128x9xf32> to vector<4x32x9xf32>
    %c1 = arith.constant 1 : index
    %c0_9 = arith.constant 0 : index
    %c0_10 = arith.constant 0 : index
    %11 = vector.load %arg5[%c1, %c0_9, %c0_10] : memref<2x16x9xf32, #tpu.memory_space<vmem>>, vector<1x16x9xf32>
    %12 = vector.shape_cast %11 : vector<1x16x9xf32> to vector<16x9xf32>
    %cst_11 = arith.constant dense<0.000000e+00> : vector<128x9xf32>
    %13 = tpu.matmul %6, %12, %cst_11 {dimension_numbers = #tpu.dot_dimension_numbers<[1], [0], [0], [1], [0, 0, 1, 1], [], []>} : vector<128x16xf32>, vector<16x9xf32>, vector<128x9xf32> -> vector<128x9xf32>
    %14 = vector.shape_cast %13 : vector<128x9xf32> to vector<4x32x9xf32>
    %15 = vector.extract_strided_slice %10 {offsets = [0, 0, 0], sizes = [4, 16, 9], strides = [1, 1, 1]} : vector<4x32x9xf32> to vector<4x16x9xf32>
    %16 = vector.extract_strided_slice %14 {offsets = [0, 16, 0], sizes = [4, 16, 9], strides = [1, 1, 1]} : vector<4x32x9xf32> to vector<4x16x9xf32>
    %17 = arith.addf %15, %16 : vector<4x16x9xf32>
    %18 = vector.extract_strided_slice %10 {offsets = [0, 16, 0], sizes = [4, 16, 9], strides = [1, 1, 1]} : vector<4x32x9xf32> to vector<4x16x9xf32>
    %19 = vector.extract_strided_slice %14 {offsets = [0, 0, 0], sizes = [4, 16, 9], strides = [1, 1, 1]} : vector<4x32x9xf32> to vector<4x16x9xf32>
    %20 = arith.subf %18, %19 : vector<4x16x9xf32>
    %c0_12 = arith.constant 0 : index
    %c0_13 = arith.constant 0 : index
    %c0_14 = arith.constant 0 : index
    %21 = vector.load %arg3[%c0_12, %c0_13, %c0_14] : memref<4x32x9xf32, #tpu.memory_space<vmem>>, vector<4x16x9xf32>
    %c0_15 = arith.constant 0 : index
    %c16 = arith.constant 16 : index
    %c0_16 = arith.constant 0 : index
    %22 = vector.load %arg3[%c0_15, %c16, %c0_16] : memref<4x32x9xf32, #tpu.memory_space<vmem>>, vector<4x16x9xf32>
    %23 = arith.mulf %17, %21 : vector<4x16x9xf32>
    %24 = arith.mulf %20, %22 : vector<4x16x9xf32>
    %25 = arith.subf %23, %24 : vector<4x16x9xf32>
    %26 = arith.mulf %17, %22 : vector<4x16x9xf32>
    %27 = arith.mulf %20, %21 : vector<4x16x9xf32>
    %28 = arith.addf %26, %27 : vector<4x16x9xf32>
    %29 = tpu.concatenate %25, %28 in 1 : vector<4x16x9xf32>, vector<4x16x9xf32> -> vector<4x32x9xf32>
    %c0_17 = arith.constant 0 : index
    %c0_18 = arith.constant 0 : index
    %30 = vector.load %arg6[%c0_17, %c0_18] : memref<32x32xf32, #tpu.memory_space<vmem>>, vector<32x32xf32>
    %31 = vector.shape_cast %30 : vector<32x32xf32> to vector<1x32x32xf32>
    %32 = vector.broadcast %31 : vector<1x32x32xf32> to vector<4x32x32xf32>
    %cst_19 = arith.constant dense<0.000000e+00> : vector<4x32x9xf32>
    %33 = tpu.matmul %32, %29, %cst_19 {dimension_numbers = #tpu.dot_dimension_numbers<[2], [1], [1], [2], [0, 0, 0, 1, 1, 2], [0], [0]>} : vector<4x32x32xf32>, vector<4x32x9xf32>, vector<4x32x9xf32> -> vector<4x32x9xf32>
    %34 = vector.extract_strided_slice %33 {offsets = [0, 0, 0], sizes = [4, 16, 9], strides = [1, 1, 1]} : vector<4x32x9xf32> to vector<4x16x9xf32>
    %35 = vector.shape_cast %34 : vector<4x16x9xf32> to vector<64x9xf32>
    %36 = vector.extract_strided_slice %33 {offsets = [0, 16, 0], sizes = [4, 16, 9], strides = [1, 1, 1]} : vector<4x32x9xf32> to vector<4x16x9xf32>
    %37 = vector.shape_cast %36 : vector<4x16x9xf32> to vector<64x9xf32>
    %c0_20 = arith.constant 0 : index
    %c0_21 = arith.constant 0 : index
    %c0_22 = arith.constant 0 : index
    %38 = vector.load %arg7[%c0_20, %c0_21, %c0_22] : memref<2x9x16xf32, #tpu.memory_space<vmem>>, vector<1x9x16xf32>
    %39 = vector.shape_cast %38 : vector<1x9x16xf32> to vector<9x16xf32>
    %cst_23 = arith.constant dense<0.000000e+00> : vector<64x16xf32>
    %40 = tpu.matmul %35, %39, %cst_23 {dimension_numbers = #tpu.dot_dimension_numbers<[1], [0], [0], [1], [0, 0, 1, 1], [], []>} : vector<64x9xf32>, vector<9x16xf32>, vector<64x16xf32> -> vector<64x16xf32>
    %c1_24 = arith.constant 1 : index
    %c0_25 = arith.constant 0 : index
    %c0_26 = arith.constant 0 : index
    %41 = vector.load %arg7[%c1_24, %c0_25, %c0_26] : memref<2x9x16xf32, #tpu.memory_space<vmem>>, vector<1x9x16xf32>
    %42 = vector.shape_cast %41 : vector<1x9x16xf32> to vector<9x16xf32>
    %cst_27 = arith.constant dense<0.000000e+00> : vector<64x16xf32>
    %43 = tpu.matmul %37, %42, %cst_27 {dimension_numbers = #tpu.dot_dimension_numbers<[1], [0], [0], [1], [0, 0, 1, 1], [], []>} : vector<64x9xf32>, vector<9x16xf32>, vector<64x16xf32> -> vector<64x16xf32>
    %44 = arith.subf %40, %43 : vector<64x16xf32>
    %45 = vector.shape_cast %44 : vector<64x16xf32> to vector<4x16x16xf32>
    %c0_28 = arith.constant 0 : index
    %c0_29 = arith.constant 0 : index
    %c0_30 = arith.constant 0 : index
    %c0_31 = arith.constant 0 : index
    %46 = vector.load %arg8[%c0_28, %c0_29, %c0_30, %c0_31] : memref<1x4x16x16xf32, #tpu.memory_space<vmem>>, vector<1x4x16x16xf32>
    %47 = vector.shape_cast %46 : vector<1x4x16x16xf32> to vector<4x16x16xf32>
    %48 = vector.shape_cast %45 : vector<4x16x16xf32> to vector<1x4x16x16xf32>
    tpu.vector_store %arg8[%c0_28, %c0_29, %c0_30, %c0_31], %48 {strides = array<i32>} : memref<1x4x16x16xf32, #tpu.memory_space<vmem>>, vector<1x4x16x16xf32>,
    return
  }
  func.func @transform_0(%arg0: i32, %arg1: i32) -> (i32, i32, i32, i32) {
    %c0_i32 = arith.constant 0 : i32
    %c0_i32_0 = arith.constant 0 : i32
    %c0_i32_1 = arith.constant 0 : i32
    return %arg0, %arg1, %c0_i32, %c0_i32_0 : i32, i32, i32, i32
  }
  func.func @transform_1(%arg0: i32, %arg1: i32) -> (i32, i32, i32) {
    %c0_i32 = arith.constant 0 : i32
    %c0_i32_0 = arith.constant 0 : i32
    %c0_i32_1 = arith.constant 0 : i32
    return %arg1, %c0_i32, %c0_i32_0 : i32, i32, i32
  }
  func.func @transform_2(%arg0: i32, %arg1: i32) -> (i32, i32) {
    %c0_i32 = arith.constant 0 : i32
    %c0_i32_0 = arith.constant 0 : i32
    %c0_i32_1 = arith.constant 0 : i32
    return %c0_i32, %c0_i32_0 : i32, i32
  }
  func.func @transform_3(%arg0: i32, %arg1: i32) -> (i32, i32, i32) {
    %c0_i32 = arith.constant 0 : i32
    %c0_i32_0 = arith.constant 0 : i32
    %c0_i32_1 = arith.constant 0 : i32
    %c0_i32_2 = arith.constant 0 : i32
    return %c0_i32, %c0_i32_0, %c0_i32_1 : i32, i32, i32
  }
  func.func @transform_4(%arg0: i32, %arg1: i32) -> (i32, i32) {
    %c0_i32 = arith.constant 0 : i32
    %c0_i32_0 = arith.constant 0 : i32
    %c0_i32_1 = arith.constant 0 : i32
    return %c0_i32, %c0_i32_0 : i32, i32
  }
  func.func @transform_5(%arg0: i32, %arg1: i32) -> (i32, i32, i32) {
    %c0_i32 = arith.constant 0 : i32
    %c0_i32_0 = arith.constant 0 : i32
    %c0_i32_1 = arith.constant 0 : i32
    %c0_i32_2 = arith.constant 0 : i32
    return %c0_i32, %c0_i32_0, %c0_i32_1 : i32, i32, i32
  }
  func.func @transform_6(%arg0: i32, %arg1: i32) -> (i32, i32, i32, i32) {
    %c0_i32 = arith.constant 0 : i32
    %c0_i32_0 = arith.constant 0 : i32
    %c0_i32_1 = arith.constant 0 : i32
    return %arg0, %arg1, %c0_i32, %c0_i32_0 : i32, i32, i32, i32
  }
}

</mosaic_0001>

<llo_original>
// kernel: tpu_custom_call.1
$region0: #{tpu_custom_call.1}
  #allocation0 [shape = 'u32[]', space=smem, size = 0x4, offset = 0x4, fixed_abs, tag = 'smem constant byte address 0x4 - core index']
  #allocation1 [shape = 'u32[144,128]{1,0:T(1,128)}', space=vmem, size = 0x12000, scoped, tag = 'internal scratch']
  %s0 = inlined_call_operand.vmem [shape: f32[2,4,16,16], index: 0, kind: input, shape index: {}]
  %s1 = inlined_call_operand.vmem [shape: f32[4,32,9], index: 1, kind: input, shape index: {}]
  %s2 = inlined_call_operand.vmem [shape: f32[32,16], index: 2, kind: input, shape index: {}]
  %s3 = inlined_call_operand.vmem [shape: f32[2,16,9], index: 3, kind: input, shape index: {}]
  %s4 = inlined_call_operand.vmem [shape: f32[32,32], index: 4, kind: input, shape index: {}]
  %s5 = inlined_call_operand.vmem [shape: f32[2,9,16], index: 5, kind: input, shape index: {}]
  %s6 = inlined_call_operand.hbm [shape: f32[2,4,16,16], index: 6, kind: output, shape index: {}]
  %s7 = sld [smem:[#allocation0]]
  $region57: #{tpu_custom_call.1} parent=0
    _
  %s9 = ssub.s32 1, %s7
  %s10 = scalar_select 0, %s9, %s7
  $region1: #{tpu_custom_call.1} parent=0
    #allocation2 [shape = 'u8[65536]{0}', space=vmem, size = 0x10000, scoped, tag = 'output window, operand 0']
    #allocation3 [shape = 's32[2]{0}', space=sflag, size = 0x8, scoped, tag = 'scoped memory for tpu_custom_call.1']
    %11 = vsyncpa [#allocation3], 0
    %s12 = scalar_lea.sflag [#allocation3], 1
    %13 = vsyncpa %s12, 0
    loop: start=0, step=1, limit=4
    $region2: #{tpu_custom_call.1} parent=1 // loop_pre_header
      _
    $region3: #{tpu_custom_call.1} parent=1 // loop_header
      %s15 = sphi 0, %s19
      %p16 = scmp.ge.s32.totalorder %s15, 4
      %s22 = sphi 0, %s34
      %s23 = sphi 0, %s30
      %s24 = sphi 0, %s22
      %s25 = sphi 0, %s23
      %s26 = sphi 0, %s24
      %s27 = sphi 0, %s25
      %s39 = sphi 0, %s41
      %s42 = sphi 0, %s39
      %s43 = sphi 0, %s42
      %s59 = sphi 0, %s43
      %s65 = sphi 0, %s67
      %s68 = sphi 0, %s65
      %s69 = sphi 0, %s68
      %s85 = sphi 0, %s69
      %s89 = sphi 0, %s89
      %s91 = sphi 0, %s89
      %s92 = sphi 0, %s91
      %s106 = sphi 0, %s92
      %s110 = sphi 0, %s110
      %s112 = sphi 0, %s110
      %s113 = sphi 0, %s112
      %s127 = sphi 0, %s113
      %s131 = sphi 0, %s131
      %s133 = sphi 0, %s131
      %s134 = sphi 0, %s133
      %s148 = sphi 0, %s134
      %s152 = sphi 0, %s152
      %s154 = sphi 0, %s152
      %s155 = sphi 0, %s154
      %s169 = sphi 0, %s155
      %s177 = sphi 0, %s179
      %s180 = sphi 0, %s177
      %s181 = sphi 0, %s180
      %s197 = sphi 0, %s181
    $region4: #{tpu_custom_call.1} parent=1 // loop_header_branch
      %18 = sbr.rel (%p16) target = $region8
    $region5: #{tpu_custom_call.1} parent=1 // loop_body
      %s20 = ssub.s32 %s15, 1
      %s21 = ssub.s32 %s15, 2
      %s28 = sadd.s32 1, %s23
      %p29 = scmp.ge.s32.totalorder %s28, 1
      %s30 = scalar_select %p29, 0, %s28
      %s31 = sadd.s32 1, %s22
      %s32 = scalar_select %p29, %s31, %s22
      %p33 = scmp.ge.s32.totalorder %s32, 2
      %s34 = scalar_select %p33, 0, %s32
      %s35 = ssub.s32 %s22, %s34
      %s36 = ssub.s32 %s23, %s30
      %s37 = sor.u32 %s35, %s36
      %p38 = scmp.eq.s32.totalorder %s37, 0
      %s40 = sadd.s32 %s39, 1
      %s41 = scalar_select %p38, %s39, %s40
      %p44 = pneg %p38
      %p45 = scmp.eq.s32.totalorder %s15, 1
      %p46 = por %p44, %p45
      %p47 = scmp.ne.s32.totalorder %s39, %s42
      %p48 = scmp.eq.s32.totalorder %s15, 0
      %p49 = por %p47, %p48
      %p50 = scmp.ne.s32.totalorder %s39, %s42
      %p51 = scmp.eq.s32.totalorder %s20, 1
      %p52 = por %p50, %p51
      %p53 = scmp.ne.s32.totalorder %s42, %s43
      %p54 = scmp.eq.s32.totalorder %s20, 0
      %p55 = por %p53, %p54
      %p56 = scmp.ne.s32.totalorder %s42, %s43
      %p57 = scmp.eq.s32.totalorder %s21, 1
      %p58 = por %p56, %p57
      %p60 = scmp.ne.s32.totalorder %s43, %s59
      %p61 = scmp.eq.s32.totalorder %s21, 0
      %p62 = por %p60, %p61
      %s63 = ssub.s32 %s23, %s30
      %p64 = scmp.eq.s32.totalorder %s63, 0
      %s66 = sadd.s32 %s65, 1
      %s67 = scalar_select %p64, %s65, %s66
      %p70 = pneg %p64
      %p71 = scmp.eq.s32.totalorder %s15, 1
      %p72 = por %p70, %p71
      %p73 = scmp.ne.s32.totalorder %s65, %s68
      %p74 = scmp.eq.s32.totalorder %s15, 0
      %p75 = por %p73, %p74
      %p76 = scmp.ne.s32.totalorder %s65, %s68
      %p77 = scmp.eq.s32.totalorder %s20, 1
      %p78 = por %p76, %p77
      %p79 = scmp.ne.s32.totalorder %s68, %s69
      %p80 = scmp.eq.s32.totalorder %s20, 0
      %p81 = por %p79, %p80
      %p82 = scmp.ne.s32.totalorder %s68, %s69
      %p83 = scmp.eq.s32.totalorder %s21, 1
      %p84 = por %p82, %p83
      %p86 = scmp.ne.s32.totalorder %s69, %s85
      %p87 = scmp.eq.s32.totalorder %s21, 0
      %p88 = por %p86, %p87
      %s90 = sadd.s32 %s89, 1
      %p93 = scmp.eq.s32.totalorder %s15, 1
      %p94 = scmp.ne.s32.totalorder %s89, %s91
      %p95 = scmp.eq.s32.totalorder %s15, 0
      %p96 = por %p94, %p95
      %p97 = scmp.ne.s32.totalorder %s89, %s91
      %p98 = scmp.eq.s32.totalorder %s20, 1
      %p99 = por %p97, %p98
      %p100 = scmp.ne.s32.totalorder %s91, %s92
      %p101 = scmp.eq.s32.totalorder %s20, 0
      %p102 = por %p100, %p101
      %p103 = scmp.ne.s32.totalorder %s91, %s92
      %p104 = scmp.eq.s32.totalorder %s21, 1
      %p105 = por %p103, %p104
      %p107 = scmp.ne.s32.totalorder %s92, %s106
      %p108 = scmp.eq.s32.totalorder %s21, 0
      %p109 = por %p107, %p108
      %s111 = sadd.s32 %s110, 1
      %p114 = scmp.eq.s32.totalorder %s15, 1
      %p115 = scmp.ne.s32.totalorder %s110, %s112
      %p116 = scmp.eq.s32.totalorder %s15, 0
      %p117 = por %p115, %p116
      %p118 = scmp.ne.s32.totalorder %s110, %s112
      %p119 = scmp.eq.s32.totalorder %s20, 1
      %p120 = por %p118, %p119
      %p121 = scmp.ne.s32.totalorder %s112, %s113
      %p122 = scmp.eq.s32.totalorder %s20, 0
      %p123 = por %p121, %p122
      %p124 = scmp.ne.s32.totalorder %s112, %s113
      %p125 = scmp.eq.s32.totalorder %s21, 1
      %p126 = por %p124, %p125
      %p128 = scmp.ne.s32.totalorder %s113, %s127
      %p129 = scmp.eq.s32.totalorder %s21, 0
      %p130 = por %p128, %p129
      %s132 = sadd.s32 %s131, 1
      %p135 = scmp.eq.s32.totalorder %s15, 1
      %p136 = scmp.ne.s32.totalorder %s131, %s133
      %p137 = scmp.eq.s32.totalorder %s15, 0
      %p138 = por %p136, %p137
      %p139 = scmp.ne.s32.totalorder %s131, %s133
      %p140 = scmp.eq.s32.totalorder %s20, 1
      %p141 = por %p139, %p140
      %p142 = scmp.ne.s32.totalorder %s133, %s134
      %p143 = scmp.eq.s32.totalorder %s20, 0
      %p144 = por %p142, %p143
      %p145 = scmp.ne.s32.totalorder %s133, %s134
      %p146 = scmp.eq.s32.totalorder %s21, 1
      %p147 = por %p145, %p146
      %p149 = scmp.ne.s32.totalorder %s134, %s148
      %p150 = scmp.eq.s32.totalorder %s21, 0
      %p151 = por %p149, %p150
      %s153 = sadd.s32 %s152, 1
      %p156 = scmp.eq.s32.totalorder %s15, 1
      %p157 = scmp.ne.s32.totalorder %s152, %s154
      %p158 = scmp.eq.s32.totalorder %s15, 0
      %p159 = por %p157, %p158
      %p160 = scmp.ne.s32.totalorder %s152, %s154
      %p161 = scmp.eq.s32.totalorder %s20, 1
      %p162 = por %p160, %p161
      %p163 = scmp.ne.s32.totalorder %s154, %s155
      %p164 = scmp.eq.s32.totalorder %s20, 0
      %p165 = por %p163, %p164
      %p166 = scmp.ne.s32.totalorder %s154, %s155
      %p167 = scmp.eq.s32.totalorder %s21, 1
      %p168 = por %p166, %p167
      %p170 = scmp.ne.s32.totalorder %s155, %s169
      %p171 = scmp.eq.s32.totalorder %s21, 0
      %p172 = por %p170, %p171
      %s173 = ssub.s32 %s22, %s34
      %s174 = ssub.s32 %s23, %s30
      %s175 = sor.u32 %s173, %s174
      %p176 = scmp.eq.s32.totalorder %s175, 0
      %s178 = sadd.s32 %s177, 1
      %s179 = scalar_select %p176, %s177, %s178
      %p182 = pneg %p176
      %p183 = scmp.eq.s32.totalorder %s15, 1
      %p184 = por %p182, %p183
      %p185 = scmp.ne.s32.totalorder %s177, %s180
      %p186 = scmp.eq.s32.totalorder %s15, 0
      %p187 = por %p185, %p186
      %p188 = scmp.ne.s32.totalorder %s177, %s180
      %p189 = scmp.eq.s32.totalorder %s20, 1
      %p190 = por %p188, %p189
      %p191 = scmp.ne.s32.totalorder %s180, %s181
      %p192 = scmp.eq.s32.totalorder %s20, 0
      %p193 = por %p191, %p192
      %p194 = scmp.ne.s32.totalorder %s180, %s181
      %p195 = scmp.eq.s32.totalorder %s21, 1
      %p196 = por %p194, %p195
      %p198 = scmp.ne.s32.totalorder %s181, %s197
      %p199 = scmp.eq.s32.totalorder %s21, 0
      %p200 = por %p198, %p199
      %p201 = scmp.le.s32.totalorder 1, %s15
      %p202 = scmp.lt.s32.totalorder %s15, 3
      %p203 = pnand %p201, %p202
      %p204 = pneg %p203
      // Predicated region
      $region9: #{tpu_custom_call.1} parent=5 // pred_check
        _
      $region10: #{tpu_custom_call.1} parent=5 // pred_check_branch
        %206 = sbr.rel (%p203) target = $region12
      $region11: #{tpu_custom_call.1} parent=5 // pred_region
        %s207 = ssub.s32 %s15, 1
        // Predicated region
        $region13: #{tpu_custom_call.1} parent=11 // pred_check
          %p208 = pneg %p81
        $region14: #{tpu_custom_call.1} parent=11 // pred_check_branch
          %210 = sbr.rel (%p208) target = $region16
        $region15: #{tpu_custom_call.1} parent=11 // pred_region
          %s211 = smul.u32 4, %s25
          %p212 = scmp.lt.s32.totalorder %s211, 3
          %s213 = scalar_select %p212, %s211, 3
          %s214 = smul.addr %s213, 4
          %s215 = smul.addr %s214, 8
          %s216 = scalar_lea.vmem %s1, %s215
          %s217 = smul.u32 4, %s25
        $region16: #{tpu_custom_call.1} parent=11 // pred_fallthru
          _
        // Predicated region
        $region17: #{tpu_custom_call.1} parent=11 // pred_check
          %p218 = pneg %p102
        $region18: #{tpu_custom_call.1} parent=11 // pred_check_branch
          %220 = sbr.rel (%p218) target = $region20
        $region19: #{tpu_custom_call.1} parent=11 // pred_region
          _
        $region20: #{tpu_custom_call.1} parent=11 // pred_fallthru
          _
        // Predicated region
        $region21: #{tpu_custom_call.1} parent=11 // pred_check
          %p221 = pneg %p123
        $region22: #{tpu_custom_call.1} parent=11 // pred_check_branch
          %223 = sbr.rel (%p221) target = $region24
        $region23: #{tpu_custom_call.1} parent=11 // pred_region
          _
        $region24: #{tpu_custom_call.1} parent=11 // pred_fallthru
          _
        // Predicated region
        $region25: #{tpu_custom_call.1} parent=11 // pred_check
          %p224 = pneg %p144
        $region26: #{tpu_custom_call.1} parent=11 // pred_check_branch
          %226 = sbr.rel (%p224) target = $region28
        $region27: #{tpu_custom_call.1} parent=11 // pred_region
          _
        $region28: #{tpu_custom_call.1} parent=11 // pred_fallthru
          _
        // Predicated region
        $region29: #{tpu_custom_call.1} parent=11 // pred_check
          %p227 = pneg %p165
        $region30: #{tpu_custom_call.1} parent=11 // pred_check_branch
          %229 = sbr.rel (%p227) target = $region32
        $region31: #{tpu_custom_call.1} parent=11 // pred_region
          _
        $region32: #{tpu_custom_call.1} parent=11 // pred_fallthru
          _
      $region12: #{tpu_custom_call.1} parent=5 // pred_fallthru
        _
      %p230 = scmp.lt.s32.totalorder %s15, 2
      // Predicated region
      $region33: #{tpu_custom_call.1} parent=5 // pred_check
        %p231 = pneg %p230
      $region34: #{tpu_custom_call.1} parent=5 // pred_check_branch
        %233 = sbr.rel (%p231) target = $region36
      $region35: #{tpu_custom_call.1} parent=5 // pred_region
        // Predicated region
        $region37: #{tpu_custom_call.1} parent=35 // pred_check
          %p234 = pneg %p49
        $region38: #{tpu_custom_call.1} parent=35 // pred_check_branch
          %236 = sbr.rel (%p234) target = $region40
        $region39: #{tpu_custom_call.1} parent=35 // pred_region
          %s237 = smul.u32 4, %s23
          %p238 = scmp.lt.s32.totalorder %s22, 1
          %s239 = scalar_select %p238, %s22, 1
          %p240 = scmp.lt.s32.totalorder %s237, 3
          %s241 = scalar_select %p240, %s237, 3
          %s242 = smul.addr %s241, 2
          %s243 = smul.addr %s239, 8
          %s244 = sadd.s32 %s242, %s243
          %s245 = smul.addr %s244, 8
          %s246 = scalar_lea.vmem %s0, %s245
          %s247 = smul.u32 4, %s23
        $region40: #{tpu_custom_call.1} parent=35 // pred_fallthru
          _
      $region36: #{tpu_custom_call.1} parent=5 // pred_fallthru
        _
      %p248 = scmp.le.s32.totalorder 1, %s15
      %p249 = scmp.lt.s32.totalorder %s15, 3
      %p250 = pnand %p248, %p249
      %p251 = pneg %p250
      // Predicated region
      $region41: #{tpu_custom_call.1} parent=5 // pred_check
        _
      $region42: #{tpu_custom_call.1} parent=5 // pred_check_branch
        %253 = sbr.rel (%p250) target = $region44
      $region43: #{tpu_custom_call.1} parent=5 // pred_region
        %s254 = ssub.s32 %s15, 1
        %s255 = smul.u32 4, %s25
        %p256 = scmp.lt.s32.totalorder %s24, 1
        %s257 = scalar_select %p256, %s24, 1
        %p258 = scmp.lt.s32.totalorder %s255, 3
        %s259 = scalar_select %p258, %s255, 3
        %s260 = smul.addr %s259, 2
        %s261 = smul.addr %s257, 8
        %s262 = sadd.s32 %s260, %s261
        %s263 = smul.addr %s262, 8
        %s264 = scalar_lea.vmem %s0, %s263
        %p265 = pneg %p55
        %p266 = pneg %p52
        %s267 = smul.u32 4, %s25
        %p268 = scmp.lt.s32.totalorder %s267, 3
        %s269 = scalar_select %p268, %s267, 3
        %s270 = smul.addr %s269, 4
        %s271 = smul.addr %s270, 8
        %s272 = scalar_lea.vmem %s1, %s271
        %p273 = pneg %p81
        %p274 = pneg %p78
        %p275 = pneg %p102
        %p276 = pneg %p99
        %p277 = pneg %p123
        %p278 = pneg %p120
        %p279 = pneg %p144
        %p280 = pneg %p141
        %p281 = pneg %p165
        %p282 = pneg %p162
        %p283 = pneg %p193
        %p284 = pneg %p190
        %s285 = sand.u32 %s180, 1
        %s286 = scalar_lea.sflag [#allocation3], %s285
        %s287 = sand.u32 %s180, 1
        %s288 = smul.addr %s287, 64
        %s289 = scalar_lea.vmem [#allocation2], %s288
        %s290 = smul.u32 4, %s25
        %p291 = scmp.lt.s32.totalorder %s24, 1
        %s292 = scalar_select %p291, %s24, 1
        %p293 = scmp.lt.s32.totalorder %s290, 3
        %s294 = scalar_select %p293, %s290, 3
        %s295 = smul.addr %s294, 2
        %s296 = smul.addr %s292, 8
        %s297 = sadd.s32 %s295, %s296
        %s298 = smul.addr %s297, 8
        %s299 = scalar_lea.vmem %s0, %s298
        %s300 = smul.u32 4, %s25
        %s301 = smul.u32 4, %s25
        %p302 = scmp.lt.s32.totalorder %s301, 3
        %s303 = scalar_select %p302, %s301, 3
        %s304 = smul.addr %s303, 4
        %s305 = smul.addr %s304, 8
        %s306 = scalar_lea.vmem %s1, %s305
        %s307 = smul.u32 4, %s25
        %s308 = smul.u32 4, %s25
        %v309 = vld [vmem:[%s299] sm:$0xff]
        %v310 = vld [vmem:[%s299 + $0x8] sm:$0xff]
        %v311 = vld [vmem:[%s299 + $0x10] sm:$0xff]
        %v312 = vld [vmem:[%s299 + $0x18] sm:$0xff]
        %v313 = vld [vmem:[%s299 + $0x20] sm:$0xff]
        %v314 = vld [vmem:[%s299 + $0x28] sm:$0xff]
        %v315 = vld [vmem:[%s299 + $0x30] sm:$0xff]
        %v316 = vld [vmem:[%s299 + $0x38] sm:$0xff]
        %v317 = vld [vmem:[%s2] sm:$0xff]
        %v318 = vld [vmem:[%s2 + $0x8] sm:$0xff]
        %v319 = vld [vmem:[%s2 + $0x10] sm:$0xff]
        %v320 = vld [vmem:[%s2 + $0x18] sm:$0xff]
        %vm321 = vcmask 130048
        %v323 = vsel %vm321, %v317, 0
        %v326 = vsel %vm321, %v318, 0
        %v329 = vsel %vm321, %v319, 0
        %v332 = vsel %vm321, %v320, 0
        %334 = vmatprep.subr.mxu0 0.0
        %335 = vmatpush1.msra.mxu0 0.0
        %336 = vmatprep.subr.mxu0 0.0
        %337 = vmatpush1.msra.mxu0 0.0
        %338 = vmatprep.subr.mxu0 0.0
        %339 = vmatpush1.msra.mxu0 0.0
        %340 = vmatprep.subr.mxu0 0.0
        %341 = vmatpush1.msra.mxu0 0.0
        %342 = vmatprep.subr.mxu0 0.0
        %343 = vmatpush1.msra.mxu0 0.0
        %344 = vmatprep.subr.mxu0 0.0
        %345 = vmatpush1.msra.mxu0 0.0
        %346 = vmatprep.subr.mxu0 0.0
        %347 = vmatpush1.msra.mxu0 0.0
        %348 = vmatprep.subr.mxu0 0.0
        %349 = vmatpush1.msra.mxu0 0.0
        %350 = vmatprep.subr.mxu0 0.0
        %351 = vmatpush1.msra.mxu0 0.0
        %352 = vmatprep.subr.mxu0 0.0
        %353 = vmatpush1.msra.mxu0 0.0
        %354 = vmatprep.subr.mxu0 0.0
        %355 = vmatpush1.msra.mxu0 0.0
        %356 = vmatprep.subr.mxu0 0.0
        %357 = vmatpush1.msra.mxu0 0.0
        %358 = vmatprep.subr.mxu0 0.0
        %359 = vmatpush1.msra.mxu0 0.0
        %360 = vmatprep.subr.mxu0 0.0
        %361 = vmatpush1.msra.mxu0 0.0
        %362 = vmatprep.subr.mxu0 0.0
        %363 = vmatpush1.msra.mxu0 %v310
        %364 = vmatprep.subr.mxu0 0.0
        %365 = vmatpush1.msra.mxu0 %v309
        %366 = vmatprep.subr.mxu0 0.0
        %367 = vmatpush2.msra.mxu0 0.0
        %368 = vmatprep.subr.mxu0 0.0
        %369 = vmatpush2.msra.mxu0 0.0
        %370 = vmatprep.subr.mxu0 0.0
        %371 = vmatpush2.msra.mxu0 0.0
        %372 = vmatprep.subr.mxu0 0.0
        %373 = vmatpush2.msra.mxu0 0.0
        %374 = vmatprep.subr.mxu0 0.0
        %375 = vmatpush2.msra.mxu0 0.0
        %376 = vmatprep.subr.mxu0 0.0
        %377 = vmatpush2.msra.mxu0 0.0
        %378 = vmatprep.subr.mxu0 0.0
        %379 = vmatpush2.msra.mxu0 0.0
        %380 = vmatprep.subr.mxu0 0.0
        %381 = vmatpush2.msra.mxu0 0.0
        %382 = vmatprep.subr.mxu0 0.0
        %383 = vmatpush2.msra.mxu0 0.0
        %384 = vmatprep.subr.mxu0 0.0
        %385 = vmatpush2.msra.mxu0 0.0
        %386 = vmatprep.subr.mxu0 0.0
        %387 = vmatpush2.msra.mxu0 0.0
        %388 = vmatprep.subr.mxu0 0.0
        %389 = vmatpush2.msra.mxu0 0.0
        %390 = vmatprep.subr.mxu0 0.0
        %391 = vmatpush2.msra.mxu0 0.0
        %392 = vmatprep.subr.mxu0 0.0
        %393 = vmatpush2.msra.mxu0 0.0
        %394 = vmatprep.subr.mxu0 0.0
        %395 = vmatpush2.msra.mxu0 0.0
        %396 = vmatprep.subr.mxu0 0.0
        %397 = vmatpush2.msra.mxu0 0.0
        %398 = vmatprep.mubr.f32.mxu0 0.0
        %399 = vmatmul.mubr.f32.gmra.mxu0 %v323
        %v400 = vpop.f32.mrf.mxu0
        %v401 = vadd.f32 0.0, %v400
        %v402 = vpop.f32.mrf.mxu0
        %403 = vmatprep.mubr.f32.mxu0 0.0
        %404 = vmatmul.mubr.f32.gmra.mxu0 %v326
        %v405 = vpop.f32.mrf.mxu0
        %v406 = vadd.f32 0.0, %v405
        %v407 = vpop.f32.mrf.mxu0
        %408 = vmatprep.mubr.f32.mxu0 0.0
        %409 = vmatmul.mubr.f32.gmra.mxu0 %v329
        %v410 = vpop.f32.mrf.mxu0
        %v411 = vadd.f32 0.0, %v410
        %v412 = vpop.f32.mrf.mxu0
        %413 = vmatprep.mubr.f32.mxu0 0.0
        %414 = vmatmul.mubr.f32.gmra.mxu0 %v332
        %v415 = vpop.f32.mrf.mxu0
        %v416 = vadd.f32 0.0, %v415
        %v417 = vpop.f32.mrf.mxu0
        %418 = vdwg.mxu0
        %419 = vmatprep.subr.mxu0 0.0
        %420 = vmatpush1.msra.mxu0 0.0
        %421 = vmatprep.subr.mxu0 0.0
        %422 = vmatpush1.msra.mxu0 0.0
        %423 = vmatprep.subr.mxu0 0.0
        %424 = vmatpush1.msra.mxu0 0.0
        %425 = vmatprep.subr.mxu0 0.0
        %426 = vmatpush1.msra.mxu0 0.0
        %427 = vmatprep.subr.mxu0 0.0
        %428 = vmatpush1.msra.mxu0 0.0
        %429 = vmatprep.subr.mxu0 0.0
        %430 = vmatpush1.msra.mxu0 0.0
        %431 = vmatprep.subr.mxu0 0.0
        %432 = vmatpush1.msra.mxu0 0.0
        %433 = vmatprep.subr.mxu0 0.0
        %434 = vmatpush1.msra.mxu0 0.0
        %435 = vmatprep.subr.mxu0 0.0
        %436 = vmatpush1.msra.mxu0 0.0
        %437 = vmatprep.subr.mxu0 0.0
        %438 = vmatpush1.msra.mxu0 0.0
        %439 = vmatprep.subr.mxu0 0.0
        %440 = vmatpush1.msra.mxu0 0.0
        %441 = vmatprep.subr.mxu0 0.0
        %442 = vmatpush1.msra.mxu0 0.0
        %443 = vmatprep.subr.mxu0 0.0
        %444 = vmatpush1.msra.mxu0 0.0
        %445 = vmatprep.subr.mxu0 0.0
        %446 = vmatpush1.msra.mxu0 0.0
        %447 = vmatprep.subr.mxu0 0.0
        %448 = vmatpush1.msra.mxu0 %v312
        %449 = vmatprep.subr.mxu0 0.0
        %450 = vmatpush1.msra.mxu0 %v311
        %451 = vmatprep.subr.mxu0 0.0
        %452 = vmatpush2.msra.mxu0 0.0
        %453 = vmatprep.subr.mxu0 0.0
        %454 = vmatpush2.msra.mxu0 0.0
        %455 = vmatprep.subr.mxu0 0.0
        %456 = vmatpush2.msra.mxu0 0.0
        %457 = vmatprep.subr.mxu0 0.0
        %458 = vmatpush2.msra.mxu0 0.0
        %459 = vmatprep.subr.mxu0 0.0
        %460 = vmatpush2.msra.mxu0 0.0
        %461 = vmatprep.subr.mxu0 0.0
        %462 = vmatpush2.msra.mxu0 0.0
        %463 = vmatprep.subr.mxu0 0.0
        %464 = vmatpush2.msra.mxu0 0.0
        %465 = vmatprep.subr.mxu0 0.0
        %466 = vmatpush2.msra.mxu0 0.0
        %467 = vmatprep.subr.mxu0 0.0
        %468 = vmatpush2.msra.mxu0 0.0
        %469 = vmatprep.subr.mxu0 0.0
        %470 = vmatpush2.msra.mxu0 0.0
        %471 = vmatprep.subr.mxu0 0.0
        %472 = vmatpush2.msra.mxu0 0.0
        %473 = vmatprep.subr.mxu0 0.0
        %474 = vmatpush2.msra.mxu0 0.0
        %475 = vmatprep.subr.mxu0 0.0
        %476 = vmatpush2.msra.mxu0 0.0
        %477 = vmatprep.subr.mxu0 0.0
        %478 = vmatpush2.msra.mxu0 0.0
        %479 = vmatprep.subr.mxu0 0.0
        %480 = vmatpush2.msra.mxu0 0.0
        %481 = vmatprep.subr.mxu0 0.0
        %482 = vmatpush2.msra.mxu0 0.0
        %483 = vmatprep.mubr.f32.mxu0 0.0
        %484 = vmatmul.mubr.f32.gmra.mxu0 %v323
        %v485 = vpop.f32.mrf.mxu0
        %v486 = vadd.f32 0.0, %v485
        %v487 = vpop.f32.mrf.mxu0
        %488 = vmatprep.mubr.f32.mxu0 0.0
        %489 = vmatmul.mubr.f32.gmra.mxu0 %v326
        %v490 = vpop.f32.mrf.mxu0
        %v491 = vadd.f32 0.0, %v490
        %v492 = vpop.f32.mrf.mxu0
        %493 = vmatprep.mubr.f32.mxu0 0.0
        %494 = vmatmul.mubr.f32.gmra.mxu0 %v329
        %v495 = vpop.f32.mrf.mxu0
        %v496 = vadd.f32 0.0, %v495
        %v497 = vpop.f32.mrf.mxu0
        %498 = vmatprep.mubr.f32.mxu0 0.0
        %499 = vmatmul.mubr.f32.gmra.mxu0 %v332
        %v500 = vpop.f32.mrf.mxu0
        %v501 = vadd.f32 0.0, %v500
        %v502 = vpop.f32.mrf.mxu0
        %503 = vdwg.mxu0
        %504 = vmatprep.subr.mxu0 0.0
        %505 = vmatpush1.msra.mxu0 0.0
        %506 = vmatprep.subr.mxu0 0.0
        %507 = vmatpush1.msra.mxu0 0.0
        %508 = vmatprep.subr.mxu0 0.0
        %509 = vmatpush1.msra.mxu0 0.0
        %510 = vmatprep.subr.mxu0 0.0
        %511 = vmatpush1.msra.mxu0 0.0
        %512 = vmatprep.subr.mxu0 0.0
        %513 = vmatpush1.msra.mxu0 0.0
        %514 = vmatprep.subr.mxu0 0.0
        %515 = vmatpush1.msra.mxu0 0.0
        %516 = vmatprep.subr.mxu0 0.0
        %517 = vmatpush1.msra.mxu0 0.0
        %518 = vmatprep.subr.mxu0 0.0
        %519 = vmatpush1.msra.mxu0 0.0
        %520 = vmatprep.subr.mxu0 0.0
        %521 = vmatpush1.msra.mxu0 0.0
        %522 = vmatprep.subr.mxu0 0.0
        %523 = vmatpush1.msra.mxu0 0.0
        %524 = vmatprep.subr.mxu0 0.0
        %525 = vmatpush1.msra.mxu0 0.0
        %526 = vmatprep.subr.mxu0 0.0
        %527 = vmatpush1.msra.mxu0 0.0
        %528 = vmatprep.subr.mxu0 0.0
        %529 = vmatpush1.msra.mxu0 0.0
        %530 = vmatprep.subr.mxu0 0.0
        %531 = vmatpush1.msra.mxu0 0.0
        %532 = vmatprep.subr.mxu0 0.0
        %533 = vmatpush1.msra.mxu0 %v314
        %534 = vmatprep.subr.mxu0 0.0
        %535 = vmatpush1.msra.mxu0 %v313
        %536 = vmatprep.subr.mxu0 0.0
        %537 = vmatpush2.msra.mxu0 0.0
        %538 = vmatprep.subr.mxu0 0.0
        %539 = vmatpush2.msra.mxu0 0.0
        %540 = vmatprep.subr.mxu0 0.0
        %541 = vmatpush2.msra.mxu0 0.0
        %542 = vmatprep.subr.mxu0 0.0
        %543 = vmatpush2.msra.mxu0 0.0
        %544 = vmatprep.subr.mxu0 0.0
        %545 = vmatpush2.msra.mxu0 0.0
        %546 = vmatprep.subr.mxu0 0.0
        %547 = vmatpush2.msra.mxu0 0.0
        %548 = vmatprep.subr.mxu0 0.0
        %549 = vmatpush2.msra.mxu0 0.0
        %550 = vmatprep.subr.mxu0 0.0
        %551 = vmatpush2.msra.mxu0 0.0
        %552 = vmatprep.subr.mxu0 0.0
        %553 = vmatpush2.msra.mxu0 0.0
        %554 = vmatprep.subr.mxu0 0.0
        %555 = vmatpush2.msra.mxu0 0.0
        %556 = vmatprep.subr.mxu0 0.0
        %557 = vmatpush2.msra.mxu0 0.0
        %558 = vmatprep.subr.mxu0 0.0
        %559 = vmatpush2.msra.mxu0 0.0
        %560 = vmatprep.subr.mxu0 0.0
        %561 = vmatpush2.msra.mxu0 0.0
        %562 = vmatprep.subr.mxu0 0.0
        %563 = vmatpush2.msra.mxu0 0.0
        %564 = vmatprep.subr.mxu0 0.0
        %565 = vmatpush2.msra.mxu0 0.0
        %566 = vmatprep.subr.mxu0 0.0
        %567 = vmatpush2.msra.mxu0 0.0
        %568 = vmatprep.mubr.f32.mxu0 0.0
        %569 = vmatmul.mubr.f32.gmra.mxu0 %v323
        %v570 = vpop.f32.mrf.mxu0
        %v571 = vadd.f32 0.0, %v570
        %v572 = vpop.f32.mrf.mxu0
        %573 = vmatprep.mubr.f32.mxu0 0.0
        %574 = vmatmul.mubr.f32.gmra.mxu0 %v326
        %v575 = vpop.f32.mrf.mxu0
        %v576 = vadd.f32 0.0, %v575
        %v577 = vpop.f32.mrf.mxu0
        %578 = vmatprep.mubr.f32.mxu0 0.0
        %579 = vmatmul.mubr.f32.gmra.mxu0 %v329
        %v580 = vpop.f32.mrf.mxu0
        %v581 = vadd.f32 0.0, %v580
        %v582 = vpop.f32.mrf.mxu0
        %583 = vmatprep.mubr.f32.mxu0 0.0
        %584 = vmatmul.mubr.f32.gmra.mxu0 %v332
        %v585 = vpop.f32.mrf.mxu0
        %v586 = vadd.f32 0.0, %v585
        %v587 = vpop.f32.mrf.mxu0
        %588 = vdwg.mxu0
        %589 = vmatprep.subr.mxu0 0.0
        %590 = vmatpush1.msra.mxu0 0.0
        %591 = vmatprep.subr.mxu0 0.0
        %592 = vmatpush1.msra.mxu0 0.0
        %593 = vmatprep.subr.mxu0 0.0
        %594 = vmatpush1.msra.mxu0 0.0
        %595 = vmatprep.subr.mxu0 0.0
        %596 = vmatpush1.msra.mxu0 0.0
        %597 = vmatprep.subr.mxu0 0.0
        %598 = vmatpush1.msra.mxu0 0.0
        %599 = vmatprep.subr.mxu0 0.0
        %600 = vmatpush1.msra.mxu0 0.0
        %601 = vmatprep.subr.mxu0 0.0
        %602 = vmatpush1.msra.mxu0 0.0
        %603 = vmatprep.subr.mxu0 0.0
        %604 = vmatpush1.msra.mxu0 0.0
        %605 = vmatprep.subr.mxu0 0.0
        %606 = vmatpush1.msra.mxu0 0.0
        %607 = vmatprep.subr.mxu0 0.0
        %608 = vmatpush1.msra.mxu0 0.0
        %609 = vmatprep.subr.mxu0 0.0
        %610 = vmatpush1.msra.mxu0 0.0
        %611 = vmatprep.subr.mxu0 0.0
        %612 = vmatpush1.msra.mxu0 0.0
        %613 = vmatprep.subr.mxu0 0.0
        %614 = vmatpush1.msra.mxu0 0.0
        %615 = vmatprep.subr.mxu0 0.0
        %616 = vmatpush1.msra.mxu0 0.0
        %617 = vmatprep.subr.mxu0 0.0
        %618 = vmatpush1.msra.mxu0 %v316
        %619 = vmatprep.subr.mxu0 0.0
        %620 = vmatpush1.msra.mxu0 %v315
        %621 = vmatprep.subr.mxu0 0.0
        %622 = vmatpush2.msra.mxu0 0.0
        %623 = vmatprep.subr.mxu0 0.0
        %624 = vmatpush2.msra.mxu0 0.0
        %625 = vmatprep.subr.mxu0 0.0
        %626 = vmatpush2.msra.mxu0 0.0
        %627 = vmatprep.subr.mxu0 0.0
        %628 = vmatpush2.msra.mxu0 0.0
        %629 = vmatprep.subr.mxu0 0.0
        %630 = vmatpush2.msra.mxu0 0.0
        %631 = vmatprep.subr.mxu0 0.0
        %632 = vmatpush2.msra.mxu0 0.0
        %633 = vmatprep.subr.mxu0 0.0
        %634 = vmatpush2.msra.mxu0 0.0
        %635 = vmatprep.subr.mxu0 0.0
        %636 = vmatpush2.msra.mxu0 0.0
        %637 = vmatprep.subr.mxu0 0.0
        %638 = vmatpush2.msra.mxu0 0.0
        %639 = vmatprep.subr.mxu0 0.0
        %640 = vmatpush2.msra.mxu0 0.0
        %641 = vmatprep.subr.mxu0 0.0
        %642 = vmatpush2.msra.mxu0 0.0
        %643 = vmatprep.subr.mxu0 0.0
        %644 = vmatpush2.msra.mxu0 0.0
        %645 = vmatprep.subr.mxu0 0.0
        %646 = vmatpush2.msra.mxu0 0.0
        %647 = vmatprep.subr.mxu0 0.0
        %648 = vmatpush2.msra.mxu0 0.0
        %649 = vmatprep.subr.mxu0 0.0
        %650 = vmatpush2.msra.mxu0 0.0
        %651 = vmatprep.subr.mxu0 0.0
        %652 = vmatpush2.msra.mxu0 0.0
        %653 = vmatprep.mubr.f32.mxu0 0.0
        %654 = vmatmul.mubr.f32.gmra.mxu0 %v323
        %v655 = vpop.f32.mrf.mxu0
        %v656 = vadd.f32 0.0, %v655
        %v657 = vpop.f32.mrf.mxu0
        %658 = vmatprep.mubr.f32.mxu0 0.0
        %659 = vmatmul.mubr.f32.gmra.mxu0 %v326
        %v660 = vpop.f32.mrf.mxu0
        %v661 = vadd.f32 0.0, %v660
        %v662 = vpop.f32.mrf.mxu0
        %663 = vmatprep.mubr.f32.mxu0 0.0
        %664 = vmatmul.mubr.f32.gmra.mxu0 %v329
        %v665 = vpop.f32.mrf.mxu0
        %v666 = vadd.f32 0.0, %v665
        %v667 = vpop.f32.mrf.mxu0
        %668 = vmatprep.mubr.f32.mxu0 0.0
        %669 = vmatmul.mubr.f32.gmra.mxu0 %v332
        %v670 = vpop.f32.mrf.mxu0
        %v671 = vadd.f32 0.0, %v670
        %v672 = vpop.f32.mrf.mxu0
        %673 = vdwg.mxu0
        %v674 = vld [vmem:[%s3] sm:$0xff]
        %v675 = vld [vmem:[%s3 + $0x8] sm:$0xff]
        %v677 = vsel %vm321, %v401, 0
        %v680 = vsel %vm321, %v406, 0
        %v683 = vsel %vm321, %v411, 0
        %v686 = vsel %vm321, %v416, 0
        %v689 = vsel %vm321, %v486, 0
        %v692 = vsel %vm321, %v491, 0
        %v695 = vsel %vm321, %v496, 0
        %v698 = vsel %vm321, %v501, 0
        %v701 = vsel %vm321, %v571, 0
        %v704 = vsel %vm321, %v576, 0
        %v707 = vsel %vm321, %v581, 0
        %v710 = vsel %vm321, %v586, 0
        %v713 = vsel %vm321, %v656, 0
        %v716 = vsel %vm321, %v661, 0
        %v719 = vsel %vm321, %v666, 0
        %v722 = vsel %vm321, %v671, 0
        %724 = vmatprep.subr.mxu0 0.0
        %725 = vmatpush1.msra.mxu0 0.0
        %726 = vmatprep.subr.mxu0 0.0
        %727 = vmatpush1.msra.mxu0 0.0
        %728 = vmatprep.subr.mxu0 0.0
        %729 = vmatpush1.msra.mxu0 0.0
        %730 = vmatprep.subr.mxu0 0.0
        %731 = vmatpush1.msra.mxu0 0.0
        %732 = vmatprep.subr.mxu0 0.0
        %733 = vmatpush1.msra.mxu0 0.0
        %734 = vmatprep.subr.mxu0 0.0
        %735 = vmatpush1.msra.mxu0 0.0
        %736 = vmatprep.subr.mxu0 0.0
        %737 = vmatpush1.msra.mxu0 0.0
        %738 = vmatprep.subr.mxu0 0.0
        %739 = vmatpush1.msra.mxu0 0.0
        %740 = vmatprep.subr.mxu0 0.0
        %741 = vmatpush1.msra.mxu0 0.0
        %742 = vmatprep.subr.mxu0 0.0
        %743 = vmatpush1.msra.mxu0 0.0
        %744 = vmatprep.subr.mxu0 0.0
        %745 = vmatpush1.msra.mxu0 0.0
        %746 = vmatprep.subr.mxu0 0.0
        %747 = vmatpush1.msra.mxu0 0.0
        %748 = vmatprep.subr.mxu0 0.0
        %749 = vmatpush1.msra.mxu0 0.0
        %750 = vmatprep.subr.mxu0 0.0
        %751 = vmatpush1.msra.mxu0 0.0
        %752 = vmatprep.subr.mxu0 0.0
        %753 = vmatpush1.msra.mxu0 %v675
        %754 = vmatprep.subr.mxu0 0.0
        %755 = vmatpush1.msra.mxu0 %v674
        %756 = vmatprep.subr.mxu0 0.0
        %757 = vmatpush2.msra.mxu0 0.0
        %758 = vmatprep.subr.mxu0 0.0
        %759 = vmatpush2.msra.mxu0 0.0
        %760 = vmatprep.subr.mxu0 0.0
        %761 = vmatpush2.msra.mxu0 0.0
        %762 = vmatprep.subr.mxu0 0.0
        %763 = vmatpush2.msra.mxu0 0.0
        %764 = vmatprep.subr.mxu0 0.0
        %765 = vmatpush2.msra.mxu0 0.0
        %766 = vmatprep.subr.mxu0 0.0
        %767 = vmatpush2.msra.mxu0 0.0
        %768 = vmatprep.subr.mxu0 0.0
        %769 = vmatpush2.msra.mxu0 0.0
        %770 = vmatprep.subr.mxu0 0.0
        %771 = vmatpush2.msra.mxu0 0.0
        %772 = vmatprep.subr.mxu0 0.0
        %773 = vmatpush2.msra.mxu0 0.0
        %774 = vmatprep.subr.mxu0 0.0
        %775 = vmatpush2.msra.mxu0 0.0
        %776 = vmatprep.subr.mxu0 0.0
        %777 = vmatpush2.msra.mxu0 0.0
        %778 = vmatprep.subr.mxu0 0.0
        %779 = vmatpush2.msra.mxu0 0.0
        %780 = vmatprep.subr.mxu0 0.0
        %781 = vmatpush2.msra.mxu0 0.0
        %782 = vmatprep.subr.mxu0 0.0
        %783 = vmatpush2.msra.mxu0 0.0
        %784 = vmatprep.subr.mxu0 0.0
        %785 = vmatpush2.msra.mxu0 0.0
        %786 = vmatprep.subr.mxu0 0.0
        %787 = vmatpush2.msra.mxu0 0.0
        %788 = vmatprep.mubr.f32.mxu0 0.0
        %789 = vmatmul.mubr.f32.gmra.mxu0 %v677
        %v790 = vpop.f32.mrf.mxu0
        %v791 = vadd.f32 0.0, %v790
        %v792 = vpop.f32.mrf.mxu0
        %793 = vmatprep.mubr.f32.mxu0 0.0
        %794 = vmatmul.mubr.f32.gmra.mxu0 %v680
        %v795 = vpop.f32.mrf.mxu0
        %v796 = vadd.f32 0.0, %v795
        %v797 = vpop.f32.mrf.mxu0
        %798 = vmatprep.mubr.f32.mxu0 0.0
        %799 = vmatmul.mubr.f32.gmra.mxu0 %v683
        %v800 = vpop.f32.mrf.mxu0
        %v801 = vadd.f32 0.0, %v800
        %v802 = vpop.f32.mrf.mxu0
        %803 = vmatprep.mubr.f32.mxu0 0.0
        %804 = vmatmul.mubr.f32.gmra.mxu0 %v686
        %v805 = vpop.f32.mrf.mxu0
        %v806 = vadd.f32 0.0, %v805
        %v807 = vpop.f32.mrf.mxu0
        %808 = vmatprep.mubr.f32.mxu0 0.0
        %809 = vmatmul.mubr.f32.gmra.mxu0 %v689
        %v810 = vpop.f32.mrf.mxu0
        %v811 = vadd.f32 0.0, %v810
        %v812 = vpop.f32.mrf.mxu0
        %813 = vmatprep.mubr.f32.mxu0 0.0
        %814 = vmatmul.mubr.f32.gmra.mxu0 %v692
        %v815 = vpop.f32.mrf.mxu0
        %v816 = vadd.f32 0.0, %v815
        %v817 = vpop.f32.mrf.mxu0
        %818 = vmatprep.mubr.f32.mxu0 0.0
        %819 = vmatmul.mubr.f32.gmra.mxu0 %v695
        %v820 = vpop.f32.mrf.mxu0
        %v821 = vadd.f32 0.0, %v820
        %v822 = vpop.f32.mrf.mxu0
        %823 = vmatprep.mubr.f32.mxu0 0.0
        %824 = vmatmul.mubr.f32.gmra.mxu0 %v698
        %v825 = vpop.f32.mrf.mxu0
        %v826 = vadd.f32 0.0, %v825
        %v827 = vpop.f32.mrf.mxu0
        %828 = vmatprep.mubr.f32.mxu0 0.0
        %829 = vmatmul.mubr.f32.gmra.mxu0 %v701
        %v830 = vpop.f32.mrf.mxu0
        %v831 = vadd.f32 0.0, %v830
        %v832 = vpop.f32.mrf.mxu0
        %833 = vmatprep.mubr.f32.mxu0 0.0
        %834 = vmatmul.mubr.f32.gmra.mxu0 %v704
        %v835 = vpop.f32.mrf.mxu0
        %v836 = vadd.f32 0.0, %v835
        %v837 = vpop.f32.mrf.mxu0
        %838 = vmatprep.mubr.f32.mxu0 0.0
        %839 = vmatmul.mubr.f32.gmra.mxu0 %v707
        %v840 = vpop.f32.mrf.mxu0
        %v841 = vadd.f32 0.0, %v840
        %v842 = vpop.f32.mrf.mxu0
        %843 = vmatprep.mubr.f32.mxu0 0.0
        %844 = vmatmul.mubr.f32.gmra.mxu0 %v710
        %v845 = vpop.f32.mrf.mxu0
        %v846 = vadd.f32 0.0, %v845
        %v847 = vpop.f32.mrf.mxu0
        %848 = vmatprep.mubr.f32.mxu0 0.0
        %849 = vmatmul.mubr.f32.gmra.mxu0 %v713
        %v850 = vpop.f32.mrf.mxu0
        %v851 = vadd.f32 0.0, %v850
        %v852 = vpop.f32.mrf.mxu0
        %853 = vmatprep.mubr.f32.mxu0 0.0
        %854 = vmatmul.mubr.f32.gmra.mxu0 %v716
        %v855 = vpop.f32.mrf.mxu0
        %v856 = vadd.f32 0.0, %v855
        %v857 = vpop.f32.mrf.mxu0
        %858 = vmatprep.mubr.f32.mxu0 0.0
        %859 = vmatmul.mubr.f32.gmra.mxu0 %v719
        %v860 = vpop.f32.mrf.mxu0
        %v861 = vadd.f32 0.0, %v860
        %v862 = vpop.f32.mrf.mxu0
        %863 = vmatprep.mubr.f32.mxu0 0.0
        %864 = vmatmul.mubr.f32.gmra.mxu0 %v722
        %v865 = vpop.f32.mrf.mxu0
        %v866 = vadd.f32 0.0, %v865
        %v867 = vpop.f32.mrf.mxu0
        %868 = vdwg.mxu0
        %s869 = scalar_lea.vmem %s3, 16
        %v870 = vld [vmem:[%s869] sm:$0xff]
        %v871 = vld [vmem:[%s869 + $0x8] sm:$0xff]
        %872 = vmatprep.subr.mxu0 0.0
        %873 = vmatpush1.msra.mxu0 0.0
        %874 = vmatprep.subr.mxu0 0.0
        %875 = vmatpush1.msra.mxu0 0.0
        %876 = vmatprep.subr.mxu0 0.0
        %877 = vmatpush1.msra.mxu0 0.0
        %878 = vmatprep.subr.mxu0 0.0
        %879 = vmatpush1.msra.mxu0 0.0
        %880 = vmatprep.subr.mxu0 0.0
        %881 = vmatpush1.msra.mxu0 0.0
        %882 = vmatprep.subr.mxu0 0.0
        %883 = vmatpush1.msra.mxu0 0.0
        %884 = vmatprep.subr.mxu0 0.0
        %885 = vmatpush1.msra.mxu0 0.0
        %886 = vmatprep.subr.mxu0 0.0
        %887 = vmatpush1.msra.mxu0 0.0
        %888 = vmatprep.subr.mxu0 0.0
        %889 = vmatpush1.msra.mxu0 0.0
        %890 = vmatprep.subr.mxu0 0.0
        %891 = vmatpush1.msra.mxu0 0.0
        %892 = vmatprep.subr.mxu0 0.0
        %893 = vmatpush1.msra.mxu0 0.0
        %894 = vmatprep.subr.mxu0 0.0
        %895 = vmatpush1.msra.mxu0 0.0
        %896 = vmatprep.subr.mxu0 0.0
        %897 = vmatpush1.msra.mxu0 0.0
        %898 = vmatprep.subr.mxu0 0.0
        %899 = vmatpush1.msra.mxu0 0.0
        %900 = vmatprep.subr.mxu0 0.0
        %901 = vmatpush1.msra.mxu0 %v871
        %902 = vmatprep.subr.mxu0 0.0
        %903 = vmatpush1.msra.mxu0 %v870
        %904 = vmatprep.subr.mxu0 0.0
        %905 = vmatpush2.msra.mxu0 0.0
        %906 = vmatprep.subr.mxu0 0.0
        %907 = vmatpush2.msra.mxu0 0.0
        %908 = vmatprep.subr.mxu0 0.0
        %909 = vmatpush2.msra.mxu0 0.0
        %910 = vmatprep.subr.mxu0 0.0
        %911 = vmatpush2.msra.mxu0 0.0
        %912 = vmatprep.subr.mxu0 0.0
        %913 = vmatpush2.msra.mxu0 0.0
        %914 = vmatprep.subr.mxu0 0.0
        %915 = vmatpush2.msra.mxu0 0.0
        %916 = vmatprep.subr.mxu0 0.0
        %917 = vmatpush2.msra.mxu0 0.0
        %918 = vmatprep.subr.mxu0 0.0
        %919 = vmatpush2.msra.mxu0 0.0
        %920 = vmatprep.subr.mxu0 0.0
        %921 = vmatpush2.msra.mxu0 0.0
        %922 = vmatprep.subr.mxu0 0.0
        %923 = vmatpush2.msra.mxu0 0.0
        %924 = vmatprep.subr.mxu0 0.0
        %925 = vmatpush2.msra.mxu0 0.0
        %926 = vmatprep.subr.mxu0 0.0
        %927 = vmatpush2.msra.mxu0 0.0
        %928 = vmatprep.subr.mxu0 0.0
        %929 = vmatpush2.msra.mxu0 0.0
        %930 = vmatprep.subr.mxu0 0.0
        %931 = vmatpush2.msra.mxu0 0.0
        %932 = vmatprep.subr.mxu0 0.0
        %933 = vmatpush2.msra.mxu0 0.0
        %934 = vmatprep.subr.mxu0 0.0
        %935 = vmatpush2.msra.mxu0 0.0
        %936 = vmatprep.mubr.f32.mxu0 0.0
        %937 = vmatmul.mubr.f32.gmra.mxu0 %v677
        %v938 = vpop.f32.mrf.mxu0
        %v939 = vadd.f32 0.0, %v938
        %v940 = vpop.f32.mrf.mxu0
        %941 = vmatprep.mubr.f32.mxu0 0.0
        %942 = vmatmul.mubr.f32.gmra.mxu0 %v680
        %v943 = vpop.f32.mrf.mxu0
        %v944 = vadd.f32 0.0, %v943
        %v945 = vpop.f32.mrf.mxu0
        %946 = vmatprep.mubr.f32.mxu0 0.0
        %947 = vmatmul.mubr.f32.gmra.mxu0 %v683
        %v948 = vpop.f32.mrf.mxu0
        %v949 = vadd.f32 0.0, %v948
        %v950 = vpop.f32.mrf.mxu0
        %951 = vmatprep.mubr.f32.mxu0 0.0
        %952 = vmatmul.mubr.f32.gmra.mxu0 %v686
        %v953 = vpop.f32.mrf.mxu0
        %v954 = vadd.f32 0.0, %v953
        %v955 = vpop.f32.mrf.mxu0
        %956 = vmatprep.mubr.f32.mxu0 0.0
        %957 = vmatmul.mubr.f32.gmra.mxu0 %v689
        %v958 = vpop.f32.mrf.mxu0
        %v959 = vadd.f32 0.0, %v958
        %v960 = vpop.f32.mrf.mxu0
        %961 = vmatprep.mubr.f32.mxu0 0.0
        %962 = vmatmul.mubr.f32.gmra.mxu0 %v692
        %v963 = vpop.f32.mrf.mxu0
        %v964 = vadd.f32 0.0, %v963
        %v965 = vpop.f32.mrf.mxu0
        %966 = vmatprep.mubr.f32.mxu0 0.0
        %967 = vmatmul.mubr.f32.gmra.mxu0 %v695
        %v968 = vpop.f32.mrf.mxu0
        %v969 = vadd.f32 0.0, %v968
        %v970 = vpop.f32.mrf.mxu0
        %971 = vmatprep.mubr.f32.mxu0 0.0
        %972 = vmatmul.mubr.f32.gmra.mxu0 %v698
        %v973 = vpop.f32.mrf.mxu0
        %v974 = vadd.f32 0.0, %v973
        %v975 = vpop.f32.mrf.mxu0
        %976 = vmatprep.mubr.f32.mxu0 0.0
        %977 = vmatmul.mubr.f32.gmra.mxu0 %v701
        %v978 = vpop.f32.mrf.mxu0
        %v979 = vadd.f32 0.0, %v978
        %v980 = vpop.f32.mrf.mxu0
        %981 = vmatprep.mubr.f32.mxu0 0.0
        %982 = vmatmul.mubr.f32.gmra.mxu0 %v704
        %v983 = vpop.f32.mrf.mxu0
        %v984 = vadd.f32 0.0, %v983
        %v985 = vpop.f32.mrf.mxu0
        %986 = vmatprep.mubr.f32.mxu0 0.0
        %987 = vmatmul.mubr.f32.gmra.mxu0 %v707
        %v988 = vpop.f32.mrf.mxu0
        %v989 = vadd.f32 0.0, %v988
        %v990 = vpop.f32.mrf.mxu0
        %991 = vmatprep.mubr.f32.mxu0 0.0
        %992 = vmatmul.mubr.f32.gmra.mxu0 %v710
        %v993 = vpop.f32.mrf.mxu0
        %v994 = vadd.f32 0.0, %v993
        %v995 = vpop.f32.mrf.mxu0
        %996 = vmatprep.mubr.f32.mxu0 0.0
        %997 = vmatmul.mubr.f32.gmra.mxu0 %v713
        %v998 = vpop.f32.mrf.mxu0
        %v999 = vadd.f32 0.0, %v998
        %v1000 = vpop.f32.mrf.mxu0
        %1001 = vmatprep.mubr.f32.mxu0 0.0
        %1002 = vmatmul.mubr.f32.gmra.mxu0 %v716
        %v1003 = vpop.f32.mrf.mxu0
        %v1004 = vadd.f32 0.0, %v1003
        %v1005 = vpop.f32.mrf.mxu0
        %1006 = vmatprep.mubr.f32.mxu0 0.0
        %1007 = vmatmul.mubr.f32.gmra.mxu0 %v719
        %v1008 = vpop.f32.mrf.mxu0
        %v1009 = vadd.f32 0.0, %v1008
        %v1010 = vpop.f32.mrf.mxu0
        %1011 = vmatprep.mubr.f32.mxu0 0.0
        %1012 = vmatmul.mubr.f32.gmra.mxu0 %v722
        %v1013 = vpop.f32.mrf.mxu0
        %v1014 = vadd.f32 0.0, %v1013
        %v1015 = vpop.f32.mrf.mxu0
        %1016 = vdwg.mxu0
        %v1017 = vadd.f32 %v791, %v949
        %v1018 = vadd.f32 %v796, %v954
        %v1019 = vadd.f32 %v811, %v969
        %v1020 = vadd.f32 %v816, %v974
        %v1021 = vadd.f32 %v831, %v989
        %v1022 = vadd.f32 %v836, %v994
        %v1023 = vadd.f32 %v851, %v1009
        %v1024 = vadd.f32 %v856, %v1014
        %v1025 = vsub.f32 %v801, %v939
        %v1026 = vsub.f32 %v806, %v944
        %v1027 = vsub.f32 %v821, %v959
        %v1028 = vsub.f32 %v826, %v964
        %v1029 = vsub.f32 %v841, %v979
        %v1030 = vsub.f32 %v846, %v984
        %v1031 = vsub.f32 %v861, %v999
        %v1032 = vsub.f32 %v866, %v1004
        %v1033 = vld [vmem:[%s306] sm:$0xff]
        %v1034 = vld [vmem:[%s306 + $0x8] sm:$0xff]
        %v1035 = vld [vmem:[%s306 + $0x20] sm:$0xff]
        %v1036 = vld [vmem:[%s306 + $0x28] sm:$0xff]
        %v1037 = vld [vmem:[%s306 + $0x40] sm:$0xff]
        %v1038 = vld [vmem:[%s306 + $0x48] sm:$0xff]
        %v1039 = vld [vmem:[%s306 + $0x60] sm:$0xff]
        %v1040 = vld [vmem:[%s306 + $0x68] sm:$0xff]
        %v1041 = vld [vmem:[%s306 + $0x10] sm:$0xff]
        %v1042 = vld [vmem:[%s306 + $0x18] sm:$0xff]
        %v1043 = vld [vmem:[%s306 + $0x30] sm:$0xff]
        %v1044 = vld [vmem:[%s306 + $0x38] sm:$0xff]
        %v1045 = vld [vmem:[%s306 + $0x50] sm:$0xff]
        %v1046 = vld [vmem:[%s306 + $0x58] sm:$0xff]
        %v1047 = vld [vmem:[%s306 + $0x70] sm:$0xff]
        %v1048 = vld [vmem:[%s306 + $0x78] sm:$0xff]
        %v1049 = vmul.f32 %v1017, %v1033
        %v1050 = vmul.f32 %v1018, %v1034
        %v1051 = vmul.f32 %v1019, %v1035
        %v1052 = vmul.f32 %v1020, %v1036
        %v1053 = vmul.f32 %v1021, %v1037
        %v1054 = vmul.f32 %v1022, %v1038
        %v1055 = vmul.f32 %v1023, %v1039
        %v1056 = vmul.f32 %v1024, %v1040
        %v1057 = vmul.f32 %v1025, %v1041
        %v1058 = vmul.f32 %v1026, %v1042
        %v1059 = vmul.f32 %v1027, %v1043
        %v1060 = vmul.f32 %v1028, %v1044
        %v1061 = vmul.f32 %v1029, %v1045
        %v1062 = vmul.f32 %v1030, %v1046
        %v1063 = vmul.f32 %v1031, %v1047
        %v1064 = vmul.f32 %v1032, %v1048
        %v1065 = vsub.f32 %v1049, %v1057
        %v1066 = vsub.f32 %v1050, %v1058
        %v1067 = vsub.f32 %v1051, %v1059
        %v1068 = vsub.f32 %v1052, %v1060
        %v1069 = vsub.f32 %v1053, %v1061
        %v1070 = vsub.f32 %v1054, %v1062
        %v1071 = vsub.f32 %v1055, %v1063
        %v1072 = vsub.f32 %v1056, %v1064
        %v1073 = vmul.f32 %v1017, %v1041
        %v1074 = vmul.f32 %v1018, %v1042
        %v1075 = vmul.f32 %v1019, %v1043
        %v1076 = vmul.f32 %v1020, %v1044
        %v1077 = vmul.f32 %v1021, %v1045
        %v1078 = vmul.f32 %v1022, %v1046
        %v1079 = vmul.f32 %v1023, %v1047
        %v1080 = vmul.f32 %v1024, %v1048
        %v1081 = vmul.f32 %v1025, %v1033
        %v1082 = vmul.f32 %v1026, %v1034
        %v1083 = vmul.f32 %v1027, %v1035
        %v1084 = vmul.f32 %v1028, %v1036
        %v1085 = vmul.f32 %v1029, %v1037
        %v1086 = vmul.f32 %v1030, %v1038
        %v1087 = vmul.f32 %v1031, %v1039
        %v1088 = vmul.f32 %v1032, %v1040
        %v1089 = vadd.f32 %v1073, %v1081
        %v1090 = vadd.f32 %v1074, %v1082
        %v1091 = vadd.f32 %v1075, %v1083
        %v1092 = vadd.f32 %v1076, %v1084
        %v1093 = vadd.f32 %v1077, %v1085
        %v1094 = vadd.f32 %v1078, %v1086
        %v1095 = vadd.f32 %v1079, %v1087
        %v1096 = vadd.f32 %v1080, %v1088
        %v1097 = vld [vmem:[%s4] sm:$0xff]
        %v1098 = vld [vmem:[%s4 + $0x8] sm:$0xff]
        %v1099 = vld [vmem:[%s4 + $0x10] sm:$0xff]
        %v1100 = vld [vmem:[%s4 + $0x18] sm:$0xff]
        %vm1101 = vcmask 261120
        %v1103 = vsel %vm1101, %v1097, 0
        %v1106 = vsel %vm1101, %v1098, 0
        %v1109 = vsel %vm1101, %v1099, 0
        %v1112 = vsel %vm1101, %v1100, 0
        %1114 = vmatprep.subr.mxu0 0.0
        %1115 = vmatpush1.msra.mxu0 0.0
        %1116 = vmatprep.subr.mxu0 0.0
        %1117 = vmatpush1.msra.mxu0 0.0
        %1118 = vmatprep.subr.mxu0 0.0
        %1119 = vmatpush1.msra.mxu0 0.0
        %1120 = vmatprep.subr.mxu0 0.0
        %1121 = vmatpush1.msra.mxu0 0.0
        %1122 = vmatprep.subr.mxu0 0.0
        %1123 = vmatpush1.msra.mxu0 0.0
        %1124 = vmatprep.subr.mxu0 0.0
        %1125 = vmatpush1.msra.mxu0 0.0
        %1126 = vmatprep.subr.mxu0 0.0
        %1127 = vmatpush1.msra.mxu0 0.0
        %1128 = vmatprep.subr.mxu0 0.0
        %1129 = vmatpush1.msra.mxu0 0.0
        %1130 = vmatprep.subr.mxu0 0.0
        %1131 = vmatpush1.msra.mxu0 0.0
        %1132 = vmatprep.subr.mxu0 0.0
        %1133 = vmatpush1.msra.mxu0 0.0
        %1134 = vmatprep.subr.mxu0 0.0
        %1135 = vmatpush1.msra.mxu0 0.0
        %1136 = vmatprep.subr.mxu0 0.0
        %1137 = vmatpush1.msra.mxu0 0.0
        %1138 = vmatprep.subr.mxu0 0.0
        %1139 = vmatpush1.msra.mxu0 %v1090
        %1140 = vmatprep.subr.mxu0 0.0
        %1141 = vmatpush1.msra.mxu0 %v1089
        %1142 = vmatprep.subr.mxu0 0.0
        %1143 = vmatpush1.msra.mxu0 %v1066
        %1144 = vmatprep.subr.mxu0 0.0
        %1145 = vmatpush1.msra.mxu0 %v1065
        %1146 = vmatprep.subr.mxu0 0.0
        %1147 = vmatpush2.msra.mxu0 0.0
        %1148 = vmatprep.subr.mxu0 0.0
        %1149 = vmatpush2.msra.mxu0 0.0
        %1150 = vmatprep.subr.mxu0 0.0
        %1151 = vmatpush2.msra.mxu0 0.0
        %1152 = vmatprep.subr.mxu0 0.0
        %1153 = vmatpush2.msra.mxu0 0.0
        %1154 = vmatprep.subr.mxu0 0.0
        %1155 = vmatpush2.msra.mxu0 0.0
        %1156 = vmatprep.subr.mxu0 0.0
        %1157 = vmatpush2.msra.mxu0 0.0
        %1158 = vmatprep.subr.mxu0 0.0
        %1159 = vmatpush2.msra.mxu0 0.0
        %1160 = vmatprep.subr.mxu0 0.0
        %1161 = vmatpush2.msra.mxu0 0.0
        %1162 = vmatprep.subr.mxu0 0.0
        %1163 = vmatpush2.msra.mxu0 0.0
        %1164 = vmatprep.subr.mxu0 0.0
        %1165 = vmatpush2.msra.mxu0 0.0
        %1166 = vmatprep.subr.mxu0 0.0
        %1167 = vmatpush2.msra.mxu0 0.0
        %1168 = vmatprep.subr.mxu0 0.0
        %1169 = vmatpush2.msra.mxu0 0.0
        %1170 = vmatprep.subr.mxu0 0.0
        %1171 = vmatpush2.msra.mxu0 0.0
        %1172 = vmatprep.subr.mxu0 0.0
        %1173 = vmatpush2.msra.mxu0 0.0
        %1174 = vmatprep.subr.mxu0 0.0
        %1175 = vmatpush2.msra.mxu0 0.0
        %1176 = vmatprep.subr.mxu0 0.0
        %1177 = vmatpush2.msra.mxu0 0.0
        %1178 = vmatprep.mubr.f32.mxu0 0.0
        %1179 = vmatmul.mubr.f32.gmra.mxu0 %v1103
        %v1180 = vpop.f32.mrf.mxu0
        %v1181 = vadd.f32 0.0, %v1180
        %v1182 = vpop.f32.mrf.mxu0
        %1183 = vmatprep.mubr.f32.mxu0 0.0
        %1184 = vmatmul.mubr.f32.gmra.mxu0 %v1106
        %v1185 = vpop.f32.mrf.mxu0
        %v1186 = vadd.f32 0.0, %v1185
        %v1187 = vpop.f32.mrf.mxu0
        %1188 = vmatprep.mubr.f32.mxu0 0.0
        %1189 = vmatmul.mubr.f32.gmra.mxu0 %v1109
        %v1190 = vpop.f32.mrf.mxu0
        %v1191 = vadd.f32 0.0, %v1190
        %v1192 = vpop.f32.mrf.mxu0
        %1193 = vmatprep.mubr.f32.mxu0 0.0
        %1194 = vmatmul.mubr.f32.gmra.mxu0 %v1112
        %v1195 = vpop.f32.mrf.mxu0
        %v1196 = vadd.f32 0.0, %v1195
        %v1197 = vpop.f32.mrf.mxu0
        %1198 = vdwg.mxu0
        %1199 = vmatprep.subr.mxu0 0.0
        %1200 = vmatpush1.msra.mxu0 0.0
        %1201 = vmatprep.subr.mxu0 0.0
        %1202 = vmatpush1.msra.mxu0 0.0
        %1203 = vmatprep.subr.mxu0 0.0
        %1204 = vmatpush1.msra.mxu0 0.0
        %1205 = vmatprep.subr.mxu0 0.0
        %1206 = vmatpush1.msra.mxu0 0.0
        %1207 = vmatprep.subr.mxu0 0.0
        %1208 = vmatpush1.msra.mxu0 0.0
        %1209 = vmatprep.subr.mxu0 0.0
        %1210 = vmatpush1.msra.mxu0 0.0
        %1211 = vmatprep.subr.mxu0 0.0
        %1212 = vmatpush1.msra.mxu0 0.0
        %1213 = vmatprep.subr.mxu0 0.0
        %1214 = vmatpush1.msra.mxu0 0.0
        %1215 = vmatprep.subr.mxu0 0.0
        %1216 = vmatpush1.msra.mxu0 0.0
        %1217 = vmatprep.subr.mxu0 0.0
        %1218 = vmatpush1.msra.mxu0 0.0
        %1219 = vmatprep.subr.mxu0 0.0
        %1220 = vmatpush1.msra.mxu0 0.0
        %1221 = vmatprep.subr.mxu0 0.0
        %1222 = vmatpush1.msra.mxu0 0.0
        %1223 = vmatprep.subr.mxu0 0.0
        %1224 = vmatpush1.msra.mxu0 %v1092
        %1225 = vmatprep.subr.mxu0 0.0
        %1226 = vmatpush1.msra.mxu0 %v1091
        %1227 = vmatprep.subr.mxu0 0.0
        %1228 = vmatpush1.msra.mxu0 %v1068
        %1229 = vmatprep.subr.mxu0 0.0
        %1230 = vmatpush1.msra.mxu0 %v1067
        %1231 = vmatprep.subr.mxu0 0.0
        %1232 = vmatpush2.msra.mxu0 0.0
        %1233 = vmatprep.subr.mxu0 0.0
        %1234 = vmatpush2.msra.mxu0 0.0
        %1235 = vmatprep.subr.mxu0 0.0
        %1236 = vmatpush2.msra.mxu0 0.0
        %1237 = vmatprep.subr.mxu0 0.0
        %1238 = vmatpush2.msra.mxu0 0.0
        %1239 = vmatprep.subr.mxu0 0.0
        %1240 = vmatpush2.msra.mxu0 0.0
        %1241 = vmatprep.subr.mxu0 0.0
        %1242 = vmatpush2.msra.mxu0 0.0
        %1243 = vmatprep.subr.mxu0 0.0
        %1244 = vmatpush2.msra.mxu0 0.0
        %1245 = vmatprep.subr.mxu0 0.0
        %1246 = vmatpush2.msra.mxu0 0.0
        %1247 = vmatprep.subr.mxu0 0.0
        %1248 = vmatpush2.msra.mxu0 0.0
        %1249 = vmatprep.subr.mxu0 0.0
        %1250 = vmatpush2.msra.mxu0 0.0
        %1251 = vmatprep.subr.mxu0 0.0
        %1252 = vmatpush2.msra.mxu0 0.0
        %1253 = vmatprep.subr.mxu0 0.0
        %1254 = vmatpush2.msra.mxu0 0.0
        %1255 = vmatprep.subr.mxu0 0.0
        %1256 = vmatpush2.msra.mxu0 0.0
        %1257 = vmatprep.subr.mxu0 0.0
        %1258 = vmatpush2.msra.mxu0 0.0
        %1259 = vmatprep.subr.mxu0 0.0
        %1260 = vmatpush2.msra.mxu0 0.0
        %1261 = vmatprep.subr.mxu0 0.0
        %1262 = vmatpush2.msra.mxu0 0.0
        %1263 = vmatprep.mubr.f32.mxu0 0.0
        %1264 = vmatmul.mubr.f32.gmra.mxu0 %v1103
        %v1265 = vpop.f32.mrf.mxu0
        %v1266 = vadd.f32 0.0, %v1265
        %v1267 = vpop.f32.mrf.mxu0
        %1268 = vmatprep.mubr.f32.mxu0 0.0
        %1269 = vmatmul.mubr.f32.gmra.mxu0 %v1106
        %v1270 = vpop.f32.mrf.mxu0
        %v1271 = vadd.f32 0.0, %v1270
        %v1272 = vpop.f32.mrf.mxu0
        %1273 = vmatprep.mubr.f32.mxu0 0.0
        %1274 = vmatmul.mubr.f32.gmra.mxu0 %v1109
        %v1275 = vpop.f32.mrf.mxu0
        %v1276 = vadd.f32 0.0, %v1275
        %v1277 = vpop.f32.mrf.mxu0
        %1278 = vmatprep.mubr.f32.mxu0 0.0
        %1279 = vmatmul.mubr.f32.gmra.mxu0 %v1112
        %v1280 = vpop.f32.mrf.mxu0
        %v1281 = vadd.f32 0.0, %v1280
        %v1282 = vpop.f32.mrf.mxu0
        %1283 = vdwg.mxu0
        %1284 = vmatprep.subr.mxu0 0.0
        %1285 = vmatpush1.msra.mxu0 0.0
        %1286 = vmatprep.subr.mxu0 0.0
        %1287 = vmatpush1.msra.mxu0 0.0
        %1288 = vmatprep.subr.mxu0 0.0
        %1289 = vmatpush1.msra.mxu0 0.0
        %1290 = vmatprep.subr.mxu0 0.0
        %1291 = vmatpush1.msra.mxu0 0.0
        %1292 = vmatprep.subr.mxu0 0.0
        %1293 = vmatpush1.msra.mxu0 0.0
        %1294 = vmatprep.subr.mxu0 0.0
        %1295 = vmatpush1.msra.mxu0 0.0
        %1296 = vmatprep.subr.mxu0 0.0
        %1297 = vmatpush1.msra.mxu0 0.0
        %1298 = vmatprep.subr.mxu0 0.0
        %1299 = vmatpush1.msra.mxu0 0.0
        %1300 = vmatprep.subr.mxu0 0.0
        %1301 = vmatpush1.msra.mxu0 0.0
        %1302 = vmatprep.subr.mxu0 0.0
        %1303 = vmatpush1.msra.mxu0 0.0
        %1304 = vmatprep.subr.mxu0 0.0
        %1305 = vmatpush1.msra.mxu0 0.0
        %1306 = vmatprep.subr.mxu0 0.0
        %1307 = vmatpush1.msra.mxu0 0.0
        %1308 = vmatprep.subr.mxu0 0.0
        %1309 = vmatpush1.msra.mxu0 %v1094
        %1310 = vmatprep.subr.mxu0 0.0
        %1311 = vmatpush1.msra.mxu0 %v1093
        %1312 = vmatprep.subr.mxu0 0.0
        %1313 = vmatpush1.msra.mxu0 %v1070
        %1314 = vmatprep.subr.mxu0 0.0
        %1315 = vmatpush1.msra.mxu0 %v1069
        %1316 = vmatprep.subr.mxu0 0.0
        %1317 = vmatpush2.msra.mxu0 0.0
        %1318 = vmatprep.subr.mxu0 0.0
        %1319 = vmatpush2.msra.mxu0 0.0
        %1320 = vmatprep.subr.mxu0 0.0
        %1321 = vmatpush2.msra.mxu0 0.0
        %1322 = vmatprep.subr.mxu0 0.0
        %1323 = vmatpush2.msra.mxu0 0.0
        %1324 = vmatprep.subr.mxu0 0.0
        %1325 = vmatpush2.msra.mxu0 0.0
        %1326 = vmatprep.subr.mxu0 0.0
        %1327 = vmatpush2.msra.mxu0 0.0
        %1328 = vmatprep.subr.mxu0 0.0
        %1329 = vmatpush2.msra.mxu0 0.0
        %1330 = vmatprep.subr.mxu0 0.0
        %1331 = vmatpush2.msra.mxu0 0.0
        %1332 = vmatprep.subr.mxu0 0.0
        %1333 = vmatpush2.msra.mxu0 0.0
        %1334 = vmatprep.subr.mxu0 0.0
        %1335 = vmatpush2.msra.mxu0 0.0
        %1336 = vmatprep.subr.mxu0 0.0
        %1337 = vmatpush2.msra.mxu0 0.0
        %1338 = vmatprep.subr.mxu0 0.0
        %1339 = vmatpush2.msra.mxu0 0.0
        %1340 = vmatprep.subr.mxu0 0.0
        %1341 = vmatpush2.msra.mxu0 0.0
        %1342 = vmatprep.subr.mxu0 0.0
        %1343 = vmatpush2.msra.mxu0 0.0
        %1344 = vmatprep.subr.mxu0 0.0
        %1345 = vmatpush2.msra.mxu0 0.0
        %1346 = vmatprep.subr.mxu0 0.0
        %1347 = vmatpush2.msra.mxu0 0.0
        %1348 = vmatprep.mubr.f32.mxu0 0.0
        %1349 = vmatmul.mubr.f32.gmra.mxu0 %v1103
        %v1350 = vpop.f32.mrf.mxu0
        %v1351 = vadd.f32 0.0, %v1350
        %v1352 = vpop.f32.mrf.mxu0
        %1353 = vmatprep.mubr.f32.mxu0 0.0
        %1354 = vmatmul.mubr.f32.gmra.mxu0 %v1106
        %v1355 = vpop.f32.mrf.mxu0
        %v1356 = vadd.f32 0.0, %v1355
        %v1357 = vpop.f32.mrf.mxu0
        %1358 = vmatprep.mubr.f32.mxu0 0.0
        %1359 = vmatmul.mubr.f32.gmra.mxu0 %v1109
        %v1360 = vpop.f32.mrf.mxu0
        %v1361 = vadd.f32 0.0, %v1360
        %v1362 = vpop.f32.mrf.mxu0
        %1363 = vmatprep.mubr.f32.mxu0 0.0
        %1364 = vmatmul.mubr.f32.gmra.mxu0 %v1112
        %v1365 = vpop.f32.mrf.mxu0
        %v1366 = vadd.f32 0.0, %v1365
        %v1367 = vpop.f32.mrf.mxu0
        %1368 = vdwg.mxu0
        %1369 = vmatprep.subr.mxu0 0.0
        %1370 = vmatpush1.msra.mxu0 0.0
        %1371 = vmatprep.subr.mxu0 0.0
        %1372 = vmatpush1.msra.mxu0 0.0
        %1373 = vmatprep.subr.mxu0 0.0
        %1374 = vmatpush1.msra.mxu0 0.0
        %1375 = vmatprep.subr.mxu0 0.0
        %1376 = vmatpush1.msra.mxu0 0.0
        %1377 = vmatprep.subr.mxu0 0.0
        %1378 = vmatpush1.msra.mxu0 0.0
        %1379 = vmatprep.subr.mxu0 0.0
        %1380 = vmatpush1.msra.mxu0 0.0
        %1381 = vmatprep.subr.mxu0 0.0
        %1382 = vmatpush1.msra.mxu0 0.0
        %1383 = vmatprep.subr.mxu0 0.0
        %1384 = vmatpush1.msra.mxu0 0.0
        %1385 = vmatprep.subr.mxu0 0.0
        %1386 = vmatpush1.msra.mxu0 0.0
        %1387 = vmatprep.subr.mxu0 0.0
        %1388 = vmatpush1.msra.mxu0 0.0
        %1389 = vmatprep.subr.mxu0 0.0
        %1390 = vmatpush1.msra.mxu0 0.0
        %1391 = vmatprep.subr.mxu0 0.0
        %1392 = vmatpush1.msra.mxu0 0.0
        %1393 = vmatprep.subr.mxu0 0.0
        %1394 = vmatpush1.msra.mxu0 %v1096
        %1395 = vmatprep.subr.mxu0 0.0
        %1396 = vmatpush1.msra.mxu0 %v1095
        %1397 = vmatprep.subr.mxu0 0.0
        %1398 = vmatpush1.msra.mxu0 %v1072
        %1399 = vmatprep.subr.mxu0 0.0
        %1400 = vmatpush1.msra.mxu0 %v1071
        %1401 = vmatprep.subr.mxu0 0.0
        %1402 = vmatpush2.msra.mxu0 0.0
        %1403 = vmatprep.subr.mxu0 0.0
        %1404 = vmatpush2.msra.mxu0 0.0
        %1405 = vmatprep.subr.mxu0 0.0
        %1406 = vmatpush2.msra.mxu0 0.0
        %1407 = vmatprep.subr.mxu0 0.0
        %1408 = vmatpush2.msra.mxu0 0.0
        %1409 = vmatprep.subr.mxu0 0.0
        %1410 = vmatpush2.msra.mxu0 0.0
        %1411 = vmatprep.subr.mxu0 0.0
        %1412 = vmatpush2.msra.mxu0 0.0
        %1413 = vmatprep.subr.mxu0 0.0
        %1414 = vmatpush2.msra.mxu0 0.0
        %1415 = vmatprep.subr.mxu0 0.0
        %1416 = vmatpush2.msra.mxu0 0.0
        %1417 = vmatprep.subr.mxu0 0.0
        %1418 = vmatpush2.msra.mxu0 0.0
        %1419 = vmatprep.subr.mxu0 0.0
        %1420 = vmatpush2.msra.mxu0 0.0
        %1421 = vmatprep.subr.mxu0 0.0
        %1422 = vmatpush2.msra.mxu0 0.0
        %1423 = vmatprep.subr.mxu0 0.0
        %1424 = vmatpush2.msra.mxu0 0.0
        %1425 = vmatprep.subr.mxu0 0.0
        %1426 = vmatpush2.msra.mxu0 0.0
        %1427 = vmatprep.subr.mxu0 0.0
        %1428 = vmatpush2.msra.mxu0 0.0
        %1429 = vmatprep.subr.mxu0 0.0
        %1430 = vmatpush2.msra.mxu0 0.0
        %1431 = vmatprep.subr.mxu0 0.0
        %1432 = vmatpush2.msra.mxu0 0.0
        %1433 = vmatprep.mubr.f32.mxu0 0.0
        %1434 = vmatmul.mubr.f32.gmra.mxu0 %v1103
        %v1435 = vpop.f32.mrf.mxu0
        %v1436 = vadd.f32 0.0, %v1435
        %v1437 = vpop.f32.mrf.mxu0
        %1438 = vmatprep.mubr.f32.mxu0 0.0
        %1439 = vmatmul.mubr.f32.gmra.mxu0 %v1106
        %v1440 = vpop.f32.mrf.mxu0
        %v1441 = vadd.f32 0.0, %v1440
        %v1442 = vpop.f32.mrf.mxu0
        %1443 = vmatprep.mubr.f32.mxu0 0.0
        %1444 = vmatmul.mubr.f32.gmra.mxu0 %v1109
        %v1445 = vpop.f32.mrf.mxu0
        %v1446 = vadd.f32 0.0, %v1445
        %v1447 = vpop.f32.mrf.mxu0
        %1448 = vmatprep.mubr.f32.mxu0 0.0
        %1449 = vmatmul.mubr.f32.gmra.mxu0 %v1112
        %v1450 = vpop.f32.mrf.mxu0
        %v1451 = vadd.f32 0.0, %v1450
        %v1452 = vpop.f32.mrf.mxu0
        %1453 = vdwg.mxu0
        %v1454 = vld [vmem:[%s5] sm:$0xff]
        %v1455 = vld [vmem:[%s5 + $0x8] sm:$0x1]
        %vm1456 = vcmask 72704
        %v1458 = vsel %vm1456, %v1181, 0
        %v1461 = vsel %vm1456, %v1186, 0
        %v1464 = vsel %vm1456, %v1266, 0
        %v1467 = vsel %vm1456, %v1271, 0
        %v1470 = vsel %vm1456, %v1351, 0
        %v1473 = vsel %vm1456, %v1356, 0
        %v1476 = vsel %vm1456, %v1436, 0
        %v1479 = vsel %vm1456, %v1441, 0
        %vm1481 = vcmask 1040384
        %v1483 = vsel %vm1481, %v1455, 0
        %1485 = vmatprep.subr.mxu0 0.0
        %1486 = vmatpush1.msra.mxu0 0.0
        %1487 = vmatprep.subr.mxu0 0.0
        %1488 = vmatpush1.msra.mxu0 0.0
        %1489 = vmatprep.subr.mxu0 0.0
        %1490 = vmatpush1.msra.mxu0 0.0
        %1491 = vmatprep.subr.mxu0 0.0
        %1492 = vmatpush1.msra.mxu0 0.0
        %1493 = vmatprep.subr.mxu0 0.0
        %1494 = vmatpush1.msra.mxu0 0.0
        %1495 = vmatprep.subr.mxu0 0.0
        %1496 = vmatpush1.msra.mxu0 0.0
        %1497 = vmatprep.subr.mxu0 0.0
        %1498 = vmatpush1.msra.mxu0 0.0
        %1499 = vmatprep.subr.mxu0 0.0
        %1500 = vmatpush1.msra.mxu0 0.0
        %1501 = vmatprep.subr.mxu0 0.0
        %1502 = vmatpush1.msra.mxu0 0.0
        %1503 = vmatprep.subr.mxu0 0.0
        %1504 = vmatpush1.msra.mxu0 0.0
        %1505 = vmatprep.subr.mxu0 0.0
        %1506 = vmatpush1.msra.mxu0 0.0
        %1507 = vmatprep.subr.mxu0 0.0
        %1508 = vmatpush1.msra.mxu0 0.0
        %1509 = vmatprep.subr.mxu0 0.0
        %1510 = vmatpush1.msra.mxu0 0.0
        %1511 = vmatprep.subr.mxu0 0.0
        %1512 = vmatpush1.msra.mxu0 0.0
        %1513 = vmatprep.subr.mxu0 0.0
        %1514 = vmatpush1.msra.mxu0 %v1483
        %1515 = vmatprep.subr.mxu0 0.0
        %1516 = vmatpush1.msra.mxu0 %v1454
        %1517 = vmatprep.subr.mxu0 0.0
        %1518 = vmatpush2.msra.mxu0 0.0
        %1519 = vmatprep.subr.mxu0 0.0
        %1520 = vmatpush2.msra.mxu0 0.0
        %1521 = vmatprep.subr.mxu0 0.0
        %1522 = vmatpush2.msra.mxu0 0.0
        %1523 = vmatprep.subr.mxu0 0.0
        %1524 = vmatpush2.msra.mxu0 0.0
        %1525 = vmatprep.subr.mxu0 0.0
        %1526 = vmatpush2.msra.mxu0 0.0
        %1527 = vmatprep.subr.mxu0 0.0
        %1528 = vmatpush2.msra.mxu0 0.0
        %1529 = vmatprep.subr.mxu0 0.0
        %1530 = vmatpush2.msra.mxu0 0.0
        %1531 = vmatprep.subr.mxu0 0.0
        %1532 = vmatpush2.msra.mxu0 0.0
        %1533 = vmatprep.subr.mxu0 0.0
        %1534 = vmatpush2.msra.mxu0 0.0
        %1535 = vmatprep.subr.mxu0 0.0
        %1536 = vmatpush2.msra.mxu0 0.0
        %1537 = vmatprep.subr.mxu0 0.0
        %1538 = vmatpush2.msra.mxu0 0.0
        %1539 = vmatprep.subr.mxu0 0.0
        %1540 = vmatpush2.msra.mxu0 0.0
        %1541 = vmatprep.subr.mxu0 0.0
        %1542 = vmatpush2.msra.mxu0 0.0
        %1543 = vmatprep.subr.mxu0 0.0
        %1544 = vmatpush2.msra.mxu0 0.0
        %1545 = vmatprep.subr.mxu0 0.0
        %1546 = vmatpush2.msra.mxu0 0.0
        %1547 = vmatprep.subr.mxu0 0.0
        %1548 = vmatpush2.msra.mxu0 0.0
        %1549 = vmatprep.mubr.f32.mxu0 0.0
        %1550 = vmatmul.mubr.f32.gmra.mxu0 %v1458
        %v1551 = vpop.f32.mrf.mxu0
        %v1552 = vadd.f32 0.0, %v1551
        %v1553 = vpop.f32.mrf.mxu0
        %1554 = vmatprep.mubr.f32.mxu0 0.0
        %1555 = vmatmul.mubr.f32.gmra.mxu0 %v1461
        %v1556 = vpop.f32.mrf.mxu0
        %v1557 = vadd.f32 0.0, %v1556
        %v1558 = vpop.f32.mrf.mxu0
        %1559 = vmatprep.mubr.f32.mxu0 0.0
        %1560 = vmatmul.mubr.f32.gmra.mxu0 %v1464
        %v1561 = vpop.f32.mrf.mxu0
        %v1562 = vadd.f32 0.0, %v1561
        %v1563 = vpop.f32.mrf.mxu0
        %1564 = vmatprep.mubr.f32.mxu0 0.0
        %1565 = vmatmul.mubr.f32.gmra.mxu0 %v1467
        %v1566 = vpop.f32.mrf.mxu0
        %v1567 = vadd.f32 0.0, %v1566
        %v1568 = vpop.f32.mrf.mxu0
        %1569 = vmatprep.mubr.f32.mxu0 0.0
        %1570 = vmatmul.mubr.f32.gmra.mxu0 %v1470
        %v1571 = vpop.f32.mrf.mxu0
        %v1572 = vadd.f32 0.0, %v1571
        %v1573 = vpop.f32.mrf.mxu0
        %1574 = vmatprep.mubr.f32.mxu0 0.0
        %1575 = vmatmul.mubr.f32.gmra.mxu0 %v1473
        %v1576 = vpop.f32.mrf.mxu0
        %v1577 = vadd.f32 0.0, %v1576
        %v1578 = vpop.f32.mrf.mxu0
        %1579 = vmatprep.mubr.f32.mxu0 0.0
        %1580 = vmatmul.mubr.f32.gmra.mxu0 %v1476
        %v1581 = vpop.f32.mrf.mxu0
        %v1582 = vadd.f32 0.0, %v1581
        %v1583 = vpop.f32.mrf.mxu0
        %1584 = vmatprep.mubr.f32.mxu0 0.0
        %1585 = vmatmul.mubr.f32.gmra.mxu0 %v1479
        %v1586 = vpop.f32.mrf.mxu0
        %v1587 = vadd.f32 0.0, %v1586
        %v1588 = vpop.f32.mrf.mxu0
        %1589 = vdwg.mxu0
        %s1590 = scalar_lea.vmem %s5, 16
        %v1591 = vld [vmem:[%s1590] sm:$0xff]
        %v1592 = vld [vmem:[%s1590 + $0x8] sm:$0x1]
        %v1594 = vsel %vm1456, %v1191, 0
        %v1597 = vsel %vm1456, %v1196, 0
        %v1600 = vsel %vm1456, %v1276, 0
        %v1603 = vsel %vm1456, %v1281, 0
        %v1606 = vsel %vm1456, %v1361, 0
        %v1609 = vsel %vm1456, %v1366, 0
        %v1612 = vsel %vm1456, %v1446, 0
        %v1615 = vsel %vm1456, %v1451, 0
        %v1618 = vsel %vm1481, %v1592, 0
        %1620 = vmatprep.subr.mxu0 0.0
        %1621 = vmatpush1.msra.mxu0 0.0
        %1622 = vmatprep.subr.mxu0 0.0
        %1623 = vmatpush1.msra.mxu0 0.0
        %1624 = vmatprep.subr.mxu0 0.0
        %1625 = vmatpush1.msra.mxu0 0.0
        %1626 = vmatprep.subr.mxu0 0.0
        %1627 = vmatpush1.msra.mxu0 0.0
        %1628 = vmatprep.subr.mxu0 0.0
        %1629 = vmatpush1.msra.mxu0 0.0
        %1630 = vmatprep.subr.mxu0 0.0
        %1631 = vmatpush1.msra.mxu0 0.0
        %1632 = vmatprep.subr.mxu0 0.0
        %1633 = vmatpush1.msra.mxu0 0.0
        %1634 = vmatprep.subr.mxu0 0.0
        %1635 = vmatpush1.msra.mxu0 0.0
        %1636 = vmatprep.subr.mxu0 0.0
        %1637 = vmatpush1.msra.mxu0 0.0
        %1638 = vmatprep.subr.mxu0 0.0
        %1639 = vmatpush1.msra.mxu0 0.0
        %1640 = vmatprep.subr.mxu0 0.0
        %1641 = vmatpush1.msra.mxu0 0.0
        %1642 = vmatprep.subr.mxu0 0.0
        %1643 = vmatpush1.msra.mxu0 0.0
        %1644 = vmatprep.subr.mxu0 0.0
        %1645 = vmatpush1.msra.mxu0 0.0
        %1646 = vmatprep.subr.mxu0 0.0
        %1647 = vmatpush1.msra.mxu0 0.0
        %1648 = vmatprep.subr.mxu0 0.0
        %1649 = vmatpush1.msra.mxu0 %v1618
        %1650 = vmatprep.subr.mxu0 0.0
        %1651 = vmatpush1.msra.mxu0 %v1591
        %1652 = vmatprep.subr.mxu0 0.0
        %1653 = vmatpush2.msra.mxu0 0.0
        %1654 = vmatprep.subr.mxu0 0.0
        %1655 = vmatpush2.msra.mxu0 0.0
        %1656 = vmatprep.subr.mxu0 0.0
        %1657 = vmatpush2.msra.mxu0 0.0
        %1658 = vmatprep.subr.mxu0 0.0
        %1659 = vmatpush2.msra.mxu0 0.0
        %1660 = vmatprep.subr.mxu0 0.0
        %1661 = vmatpush2.msra.mxu0 0.0
        %1662 = vmatprep.subr.mxu0 0.0
        %1663 = vmatpush2.msra.mxu0 0.0
        %1664 = vmatprep.subr.mxu0 0.0
        %1665 = vmatpush2.msra.mxu0 0.0
        %1666 = vmatprep.subr.mxu0 0.0
        %1667 = vmatpush2.msra.mxu0 0.0
        %1668 = vmatprep.subr.mxu0 0.0
        %1669 = vmatpush2.msra.mxu0 0.0
        %1670 = vmatprep.subr.mxu0 0.0
        %1671 = vmatpush2.msra.mxu0 0.0
        %1672 = vmatprep.subr.mxu0 0.0
        %1673 = vmatpush2.msra.mxu0 0.0
        %1674 = vmatprep.subr.mxu0 0.0
        %1675 = vmatpush2.msra.mxu0 0.0
        %1676 = vmatprep.subr.mxu0 0.0
        %1677 = vmatpush2.msra.mxu0 0.0
        %1678 = vmatprep.subr.mxu0 0.0
        %1679 = vmatpush2.msra.mxu0 0.0
        %1680 = vmatprep.subr.mxu0 0.0
        %1681 = vmatpush2.msra.mxu0 0.0
        %1682 = vmatprep.subr.mxu0 0.0
        %1683 = vmatpush2.msra.mxu0 0.0
        %1684 = vmatprep.mubr.f32.mxu0 0.0
        %1685 = vmatmul.mubr.f32.gmra.mxu0 %v1594
        %v1686 = vpop.f32.mrf.mxu0
        %v1687 = vadd.f32 0.0, %v1686
        %v1688 = vpop.f32.mrf.mxu0
        %1689 = vmatprep.mubr.f32.mxu0 0.0
        %1690 = vmatmul.mubr.f32.gmra.mxu0 %v1597
        %v1691 = vpop.f32.mrf.mxu0
        %v1692 = vadd.f32 0.0, %v1691
        %v1693 = vpop.f32.mrf.mxu0
        %1694 = vmatprep.mubr.f32.mxu0 0.0
        %1695 = vmatmul.mubr.f32.gmra.mxu0 %v1600
        %v1696 = vpop.f32.mrf.mxu0
        %v1697 = vadd.f32 0.0, %v1696
        %v1698 = vpop.f32.mrf.mxu0
        %1699 = vmatprep.mubr.f32.mxu0 0.0
        %1700 = vmatmul.mubr.f32.gmra.mxu0 %v1603
        %v1701 = vpop.f32.mrf.mxu0
        %v1702 = vadd.f32 0.0, %v1701
        %v1703 = vpop.f32.mrf.mxu0
        %1704 = vmatprep.mubr.f32.mxu0 0.0
        %1705 = vmatmul.mubr.f32.gmra.mxu0 %v1606
        %v1706 = vpop.f32.mrf.mxu0
        %v1707 = vadd.f32 0.0, %v1706
        %v1708 = vpop.f32.mrf.mxu0
        %1709 = vmatprep.mubr.f32.mxu0 0.0
        %1710 = vmatmul.mubr.f32.gmra.mxu0 %v1609
        %v1711 = vpop.f32.mrf.mxu0
        %v1712 = vadd.f32 0.0, %v1711
        %v1713 = vpop.f32.mrf.mxu0
        %1714 = vmatprep.mubr.f32.mxu0 0.0
        %1715 = vmatmul.mubr.f32.gmra.mxu0 %v1612
        %v1716 = vpop.f32.mrf.mxu0
        %v1717 = vadd.f32 0.0, %v1716
        %v1718 = vpop.f32.mrf.mxu0
        %1719 = vmatprep.mubr.f32.mxu0 0.0
        %1720 = vmatmul.mubr.f32.gmra.mxu0 %v1615
        %v1721 = vpop.f32.mrf.mxu0
        %v1722 = vadd.f32 0.0, %v1721
        %v1723 = vpop.f32.mrf.mxu0
        %1724 = vdwg.mxu0
        %v1725 = vsub.f32 %v1552, %v1687
        %v1726 = vsub.f32 %v1557, %v1692
        %v1727 = vsub.f32 %v1562, %v1697
        %v1728 = vsub.f32 %v1567, %v1702
        %v1729 = vsub.f32 %v1572, %v1707
        %v1730 = vsub.f32 %v1577, %v1712
        %v1731 = vsub.f32 %v1582, %v1717
        %v1732 = vsub.f32 %v1587, %v1722
        %1733 = vst.msk [vmem:[%s289] sm:$0xff] %vm321, %v1725
        %1734 = vst.msk [vmem:[%s289 + $0x8] sm:$0xff] %vm321, %v1726
        %1735 = vst.msk [vmem:[%s289 + $0x10] sm:$0xff] %vm321, %v1727
        %1736 = vst.msk [vmem:[%s289 + $0x18] sm:$0xff] %vm321, %v1728
        %1737 = vst.msk [vmem:[%s289 + $0x20] sm:$0xff] %vm321, %v1729
        %1738 = vst.msk [vmem:[%s289 + $0x28] sm:$0xff] %vm321, %v1730
        %1739 = vst.msk [vmem:[%s289 + $0x30] sm:$0xff] %vm321, %v1731
        %1740 = vst.msk [vmem:[%s289 + $0x38] sm:$0xff] %vm321, %v1732
        %s1741 = sand.u32 %s180, 1
        %s1742 = scalar_lea.sflag [#allocation3], %s1741
        %s1743 = sand.u32 %s180, 1
        %s1744 = smul.addr %s1743, 64
        %s1745 = scalar_lea.vmem [#allocation2], %s1744
        // Predicated region
        $region45: #{tpu_custom_call.1} parent=43 // pred_check
          %p1746 = pneg %p190
        $region46: #{tpu_custom_call.1} parent=43 // pred_check_branch
          %1748 = sbr.rel (%p1746) target = $region48
        $region47: #{tpu_custom_call.1} parent=43 // pred_region
          %s1749 = smul.u32 4, %s25
          %s1751 = ssub.s32 1024, 1024
          %1752 = vsyncadd %s1742, %s1751
          %s1753 = smul.addr %s1749, 2
          %s1754 = smul.addr %s24, 8
          %s1755 = sadd.s32 %s1753, %s1754
          %s1756 = smul.addr %s1755, 128
          %s1757 = scalar_lea.hbm %s6, %s1756
          %s1758 = sshll.u32 %s1745, 4
          %s1759 = int_to_ptr.vmem [resolvable:$true] %s1758
          %1764 = dma.vmem_to_hbm [thread:$0]  %s1759, 1024, %s1757, %s1742, 128, 128, 8
        $region48: #{tpu_custom_call.1} parent=43 // pred_fallthru
          _
      $region44: #{tpu_custom_call.1} parent=5 // pred_fallthru
        _
      %p1765 = scmp.le.s32.totalorder 2, %s15
      // Predicated region
      $region49: #{tpu_custom_call.1} parent=5 // pred_check
        %p1766 = pneg %p1765
      $region50: #{tpu_custom_call.1} parent=5 // pred_check_branch
        %1768 = sbr.rel (%p1766) target = $region52
      $region51: #{tpu_custom_call.1} parent=5 // pred_region
        %s1769 = ssub.s32 %s15, 2
        // Predicated region
        $region53: #{tpu_custom_call.1} parent=51 // pred_check
          %p1770 = pneg %p196
        $region54: #{tpu_custom_call.1} parent=51 // pred_check_branch
          %1772 = sbr.rel (%p1770) target = $region56
        $region55: #{tpu_custom_call.1} parent=51 // pred_region
          %s1773 = sand.u32 %s181, 1
          %s1774 = scalar_lea.sflag [#allocation3], %s1773
          %s1775 = sand.u32 %s181, 1
          %s1776 = smul.addr %s1775, 64
          %s1777 = scalar_lea.vmem [#allocation2], %s1776
          %1778 = dma.done %s1774, 1024
        $region56: #{tpu_custom_call.1} parent=51 // pred_fallthru
          _
      $region52: #{tpu_custom_call.1} parent=5 // pred_fallthru
        _
    $region6: #{tpu_custom_call.1} parent=1 // loop_footer
      %s19 = sadd.s32 1, %s15
    $region7: #{tpu_custom_call.1} parent=1 // loop_footer_branch
      %14 = sbr.rel target = $region3
    $region8: #{tpu_custom_call.1} parent=1 // loop_exit
      _
    %1779 = vsyncpa [#allocation3], 1
    %s1780 = scalar_lea.sflag [#allocation3], 1
    %1781 = vsyncpa %s1780, 1

</llo_original>
